<compile_context>
chip_gen: v7x
topology: tpu7x:2x2x1
jax: 0.10.0
libtpu: 0.0.40
codegen_flags: <defaults>
</compile_context>

<pallas_src>
import numpy as np
import jax
import jax.numpy as jnp
from jax.experimental import pallas as pl
from jax.experimental.pallas import tpu as pltpu

_VMEM_LIMIT = 48 * 1024 * 1024  # above 16/32 MiB scoped defaults, headroom vs v7x 64 MiB


# ---------------------------------------------------------------------------
# Kernel 1: row/col average pools + (3,1)/(1,3) convs + (2,1)/(1,2) max pools
# ---------------------------------------------------------------------------
def _pool_tap_kernel(x_ref, w1_ref, b1_ref, w2_ref, b2_ref, x1m_ref, x2m_ref):
    # x_ref:   (1, H, W, Cin)  f32
    # w*_ref:  (3, Cin, Cmid)  bf16        b*_ref:  (1, Cmid) f32
    # x1m_ref: (1, H2, Cmid)   f32         x2m_ref: (1, W2, Cmid) f32
    x = x_ref[0]                               # (H, W, Cin)
    H, W, _ = x.shape
    H2 = x1m_ref.shape[1]
    W2 = x2m_ref.shape[1]
    Cmid = x1m_ref.shape[2]

    x1p = jnp.sum(x, axis=1) * (1.0 / W)       # (H, Cin)  mean over width
    x2p = jnp.sum(x, axis=0) * (1.0 / H)       # (W, Cin)  mean over height

    def tap_conv(p, w_ref, bias, L):
        # "same" 3-tap conv along axis 0 of p:(L, Cin); weights (3, Cin, Cmid).
        # Three 2-D bf16 matmuls (f32 acc) + XLU rolls for the +/-1 shifts.
        pb = p.astype(jnp.bfloat16)
        u0 = jnp.dot(pb, w_ref[0], preferred_element_type=jnp.float32)
        u1 = jnp.dot(pb, w_ref[1], preferred_element_type=jnp.float32)
        u2 = jnp.dot(pb, w_ref[2], preferred_element_type=jnp.float32)
        rows = jax.lax.broadcasted_iota(jnp.int32, u1.shape, 0)
        lo = jnp.where(rows == 0, 0.0, pltpu.roll(u0, shift=1, axis=0))      # u0[h-1]
        hi = jnp.where(rows == L - 1, 0.0, pltpu.roll(u2, shift=L - 1, axis=0))  # u2[h+1]
        return u1 + lo + hi + bias             # (L, Cmid)

    o1 = tap_conv(x1p, w1_ref, b1_ref[...], H)   # (H, Cmid)
    o2 = tap_conv(x2p, w2_ref, b2_ref[...], W)   # (W, Cmid)

    if o1.shape[0] != 2 * H2:                    # odd H -> drop last row (floor pool)
        o1 = o1[: 2 * H2]
    if o2.shape[0] != 2 * W2:
        o2 = o2[: 2 * W2]

    # MaxPool2d((2,1)) / ((1,2)): pairwise max along the strip axis.
    x1m_ref[0] = jnp.max(o1.reshape(H2, 2, Cmid), axis=1)
    x2m_ref[0] = jnp.max(o2.reshape(W2, 2, Cmid), axis=1)


# ---------------------------------------------------------------------------
# Kernel 2: gate = sigmoid( conv3( relu( expand(x1m) + expand(x2m) ) ) )
# ---------------------------------------------------------------------------
def _gate_kernel(x1m_ref, x2m_ref, w3_ref, b3_ref, o_ref):
    # x1m_ref: (1, TH, Cmid) f32    x2m_ref: (1, W2, Cmid) f32
    # w3_ref:  (Cmid, Cout)  bf16   b3_ref:  (1, Cout) f32
    # o_ref:   (1, TH, W2, Cout) f32
    x1 = x1m_ref[0]                                   # (TH, Cmid)
    x2 = x2m_ref[0]                                   # (W2, Cmid)
    th, cmid = x1.shape
    nw2 = x2.shape[0]
    cout = o_ref.shape[3]

    z = jnp.maximum(x1[:, None, :] + x2[None, :, :], 0.0)          # (TH, W2, Cmid)
    zb = z.reshape(th * nw2, cmid).astype(jnp.bfloat16)
    v = jnp.dot(zb, w3_ref[...], preferred_element_type=jnp.float32) + b3_ref[...]
    gate = pl.reciprocal(1.0 + jnp.exp(-v), approx=True)           # sigmoid (EUP)
    o_ref[0] = gate.reshape(th, nw2, cout)


# ---------------------------------------------------------------------------
# Wrapper
# ---------------------------------------------------------------------------
def _pick_h_tile(h2, cap=128):
    if h2 <= cap:
        return h2
    for t in range(cap, 7, -1):
        if h2 % t == 0 and t % 8 == 0:
            return t
    return h2


def sp_block_v1_forward(x_nchw, params):
    """SPBlockv1.forward (norm_layer=None). x: (B, Cin, H, W) -> (B, Cout, H//2, W//2)."""
    x = jnp.transpose(x_nchw, (0, 2, 3, 1)).astype(jnp.float32)     # NHWC
    B, H, W, Cin = x.shape
    Cmid = params["w1"].shape[2]
    Cout = params["w3"].shape[1]
    H2, W2 = H // 2, W // 2

    w1 = params["w1"].astype(jnp.bfloat16)
    w2 = params["w2"].astype(jnp.bfloat16)
    w3 = params["w3"].astype(jnp.bfloat16)
    b1 = params["b1"].reshape(1, Cmid).astype(jnp.float32)
    b2 = params["b2"].reshape(1, Cmid).astype(jnp.float32)
    b3 = params["b3"].reshape(1, Cout).astype(jnp.float32)

    # --- kernel 1: pooled strips -------------------------------------------
    x1m, x2m = pl.pallas_call(
        _pool_tap_kernel,
        out_shape=(jax.ShapeDtypeStruct((B, H2, Cmid), jnp.float32),
                   jax.ShapeDtypeStruct((B, W2, Cmid), jnp.float32)),
        grid=(B,),
        in_specs=[
            pl.BlockSpec((1, H, W, Cin), lambda b: (b, 0, 0, 0)),
            pl.BlockSpec((3, Cin, Cmid), lambda b: (0, 0, 0)),
            pl.BlockSpec((1, Cmid), lambda b: (0, 0)),
            pl.BlockSpec((3, Cin, Cmid), lambda b: (0, 0, 0)),
            pl.BlockSpec((1, Cmid), lambda b: (0, 0)),
        ],
        out_specs=(
            pl.BlockSpec((1, H2, Cmid), lambda b: (b, 0, 0)),
            pl.BlockSpec((1, W2, Cmid), lambda b: (b, 0, 0)),
        ),
        compiler_params=pltpu.CompilerParams(
            dimension_semantics=("parallel",),
            vmem_limit_bytes=_VMEM_LIMIT),
    )(x, w1, b1, w2, b2)

    # --- kernel 2: gating pass, tiled over (B, H2) ---------------------------
    th = _pick_h_tile(H2)
    gate = pl.pallas_call(
        _gate_kernel,
        out_shape=jax.ShapeDtypeStruct((B, H2, W2, Cout), jnp.float32),
        grid=(B, H2 // th),
        in_specs=[
            pl.BlockSpec((1, th, Cmid), lambda b, i: (b, i, 0)),
            pl.BlockSpec((1, W2, Cmid), lambda b, i: (b, 0, 0)),
            pl.BlockSpec((Cmid, Cout), lambda b, i: (0, 0)),
            pl.BlockSpec((1, Cout), lambda b, i: (0, 0)),
        ],
        out_specs=pl.BlockSpec((1, th, W2, Cout), lambda b, i: (b, i, 0, 0)),
        compiler_params=pltpu.CompilerParams(
            dimension_semantics=("parallel", "parallel"),
            vmem_limit_bytes=_VMEM_LIMIT),
    )(x1m, x2m, w3, b3)

    return jnp.transpose(gate, (0, 3, 1, 2))                        # back to NCHW


# ---------------------------------------------------------------------------
# Parameters (deterministic, in-script).  Layout: w1[k, c, o] == torch
# conv1.weight[o, c, k, 0];  w2[k, c, o] == conv2.weight[o, c, 0, k];
# w3[c, o] == conv3.weight[o, c, 0, 0].
# ---------------------------------------------------------------------------
def init_params(key, inplanes, outplanes):
    mid = outplanes                      # midplanes = outplanes in SPBlockv1
    ks = jax.random.split(key, 6)
    return {
        "w1": jax.random.normal(ks[0], (3, inplanes, mid), jnp.float32) / np.sqrt(3 * inplanes),
        "b1": 0.05 * jax.random.normal(ks[1], (mid,), jnp.float32),
        "w2": jax.random.normal(ks[2], (3, inplanes, mid), jnp.float32) / np.sqrt(3 * inplanes),
        "b2": 0.05 * jax.random.normal(ks[3], (mid,), jnp.float32),
        "w3": jax.random.normal(ks[4], (mid, outplanes), jnp.float32) / np.sqrt(mid),
        "b3": 0.05 * jax.random.normal(ks[5], (outplanes,), jnp.float32),
    }


# ---------------------------------------------------------------------------
# Pure-JAX f32 reference (mirrors the PyTorch forward with norm_layer=None)
# ---------------------------------------------------------------------------
def forward_ref(x_nchw, params):
    x = jnp.transpose(x_nchw, (0, 2, 3, 1)).astype(jnp.float32)
    B, H, W, Cin = x.shape
    x1p = jnp.mean(x, axis=2)                         # (B, H, Cin)
    x2p = jnp.mean(x, axis=1)                         # (B, W, Cin)

    def tap(p, w, b, L):
        pp = jnp.pad(p, ((0, 0), (1, 1), (0, 0)))
        out = sum(jnp.einsum("blc,co->blo", pp[:, k:k + L], w[k]) for k in range(3))
        return out + b[None, None, :]

    o1 = tap(x1p, params["w1"], params["b1"], H)      # (B, H, Cmid)
    o2 = tap(x2p, params["w2"], params["b2"], W)      # (B, W, Cmid)
    H2, W2 = H // 2, W // 2
    x1m = jnp.max(o1[:, : 2 * H2].reshape(B, H2, 2, -1), axis=2)
    x2m = jnp.max(o2[:, : 2 * W2].reshape(B, W2, 2, -1), axis=2)
    z = jnp.maximum(x1m[:, :, None, :] + x2m[:, None, :, :], 0.0)
    gate = jax.nn.sigmoid(jnp.einsum("bhwc,co->bhwo", z, params["w3"])
                          + params["b3"][None, None, None, :])
    return jnp.transpose(gate, (0, 3, 1, 2))


if __name__ == "__main__":
    key = jax.random.PRNGKey(0)
    k_par, k_x = jax.random.split(key)

    # SPBlockv1(inplanes=4, outplanes=32) on a (2, 4, 16, 16) input.
    B, Cin, H, W = 2, 4, 16, 16
    Cout = 32
    params = init_params(k_par, Cin, Cout)
    x = jax.random.normal(k_x, (B, Cin, H, W), jnp.float32)

    fwd = jax.jit(sp_block_v1_forward)
    out = jax.block_until_ready(fwd(x, params))
    ref = jax.block_until_ready(forward_ref(x, params))

    assert out.shape == (B, Cout, H // 2, W // 2), out.shape
    assert bool(np.isfinite(np.asarray(out)).all())
    rel_err = float(jnp.max(jnp.abs(out - ref)) / (jnp.max(jnp.abs(ref)) + 1e-8))
    assert rel_err < 1e-2, f"mismatch vs reference, rel_err={rel_err}"
    print("KERNEL_OK")
</pallas_src>

<mosaic_0001>
module attributes {stable_mosaic.version = 11 : i64} {
  func.func @_pool_tap_kernel(%arg0: i32, %arg1: memref<1x16x16x4xf32, #tpu.memory_space<vmem>>, %arg2: memref<3x4x32xbf16, #tpu.memory_space<vmem>>, %arg3: memref<1x32xf32, #tpu.memory_space<vmem>>, %arg4: memref<3x4x32xbf16, #tpu.memory_space<vmem>>, %arg5: memref<1x32xf32, #tpu.memory_space<vmem>>, %arg6: memref<1x8x32xf32, #tpu.memory_space<vmem>>, %arg7: memref<1x8x32xf32, #tpu.memory_space<vmem>>) attributes {dimension_semantics = [#tpu.dimension_semantics<parallel>], iteration_bounds = array<i64: 2>, scalar_prefetch = 0 : i64, scratch_operands = 0 : i64, tpu.core_type = #tpu.core_type<tc>, window_params = [{transform_indices = @transform_0, window_bounds = array<i64: 1, 16, 16, 4>}, {pipeline_mode = #tpu.pipeline_mode<synchronous>, transform_indices = @transform_1, window_bounds = array<i64: 3, 4, 32>}, {pipeline_mode = #tpu.pipeline_mode<synchronous>, transform_indices = @transform_2, window_bounds = array<i64: 1, 32>}, {pipeline_mode = #tpu.pipeline_mode<synchronous>, transform_indices = @transform_3, window_bounds = array<i64: 3, 4, 32>}, {pipeline_mode = #tpu.pipeline_mode<synchronous>, transform_indices = @transform_4, window_bounds = array<i64: 1, 32>}, {transform_indices = @transform_5, window_bounds = array<i64: 1, 8, 32>}, {transform_indices = @transform_6, window_bounds = array<i64: 1, 8, 32>}]} {
    %c0 = arith.constant 0 : index
    %c0_0 = arith.constant 0 : index
    %c0_1 = arith.constant 0 : index
    %c0_2 = arith.constant 0 : index
    %0 = vector.load %arg1[%c0, %c0_0, %c0_1, %c0_2] : memref<1x16x16x4xf32, #tpu.memory_space<vmem>>, vector<1x16x16x4xf32>
    %1 = vector.shape_cast %0 : vector<1x16x16x4xf32> to vector<16x16x4xf32>
    %cst = arith.constant dense<0.000000e+00> : vector<16x4xf32>
    %2 = vector.multi_reduction <add>, %1, %cst [1] : vector<16x16x4xf32> to vector<16x4xf32>
    %cst_3 = arith.constant 6.250000e-02 : f32
    %3 = vector.broadcast %cst_3 : f32 to vector<16x4xf32>
    %4 = arith.mulf %2, %3 : vector<16x4xf32>
    %cst_4 = arith.constant dense<0.000000e+00> : vector<16x4xf32>
    %5 = vector.multi_reduction <add>, %1, %cst_4 [0] : vector<16x16x4xf32> to vector<16x4xf32>
    %cst_5 = arith.constant 6.250000e-02 : f32
    %6 = vector.broadcast %cst_5 : f32 to vector<16x4xf32>
    %7 = arith.mulf %5, %6 : vector<16x4xf32>
    %c0_6 = arith.constant 0 : index
    %c0_7 = arith.constant 0 : index
    %8 = vector.load %arg3[%c0_6, %c0_7] : memref<1x32xf32, #tpu.memory_space<vmem>>, vector<1x32xf32>
    %9 = arith.truncf %4 : vector<16x4xf32> to vector<16x4xbf16>
    %c0_8 = arith.constant 0 : index
    %c0_9 = arith.constant 0 : index
    %c0_10 = arith.constant 0 : index
    %10 = vector.load %arg2[%c0_8, %c0_9, %c0_10] : memref<3x4x32xbf16, #tpu.memory_space<vmem>>, vector<1x4x32xbf16>
    %11 = vector.shape_cast %10 : vector<1x4x32xbf16> to vector<4x32xbf16>
    %cst_11 = arith.constant dense<0.000000e+00> : vector<16x32xf32>
    %12 = tpu.matmul %9, %11, %cst_11 {dimension_numbers = #tpu.dot_dimension_numbers<[1], [0], [0], [1], [0, 0, 1, 1], [], []>} : vector<16x4xbf16>, vector<4x32xbf16>, vector<16x32xf32> -> vector<16x32xf32>
    %c1 = arith.constant 1 : index
    %c0_12 = arith.constant 0 : index
    %c0_13 = arith.constant 0 : index
    %13 = vector.load %arg2[%c1, %c0_12, %c0_13] : memref<3x4x32xbf16, #tpu.memory_space<vmem>>, vector<1x4x32xbf16>
    %14 = vector.shape_cast %13 : vector<1x4x32xbf16> to vector<4x32xbf16>
    %cst_14 = arith.constant dense<0.000000e+00> : vector<16x32xf32>
    %15 = tpu.matmul %9, %14, %cst_14 {dimension_numbers = #tpu.dot_dimension_numbers<[1], [0], [0], [1], [0, 0, 1, 1], [], []>} : vector<16x4xbf16>, vector<4x32xbf16>, vector<16x32xf32> -> vector<16x32xf32>
    %c2 = arith.constant 2 : index
    %c0_15 = arith.constant 0 : index
    %c0_16 = arith.constant 0 : index
    %16 = vector.load %arg2[%c2, %c0_15, %c0_16] : memref<3x4x32xbf16, #tpu.memory_space<vmem>>, vector<1x4x32xbf16>
    %17 = vector.shape_cast %16 : vector<1x4x32xbf16> to vector<4x32xbf16>
    %cst_17 = arith.constant dense<0.000000e+00> : vector<16x32xf32>
    %18 = tpu.matmul %9, %17, %cst_17 {dimension_numbers = #tpu.dot_dimension_numbers<[1], [0], [0], [1], [0, 0, 1, 1], [], []>} : vector<16x4xbf16>, vector<4x32xbf16>, vector<16x32xf32> -> vector<16x32xf32>
    %19 = tpu.iota {dimensions = array<i32: 0>} : vector<16x32xi32>
    %c0_i32 = arith.constant 0 : i32
    %20 = vector.broadcast %c0_i32 : i32 to vector<16x32xi32>
    %21 = arith.cmpi eq, %19, %20 : vector<16x32xi32>
    %c1_i32 = arith.constant 1 : i32
    %22 = tpu.dynamic_rotate %12 by %c1_i32 dim 0 : vector<16x32xf32>, i32 -> vector<16x32xf32>
    %cst_18 = arith.constant 0.000000e+00 : f32
    %23 = vector.broadcast %cst_18 : f32 to vector<16x32xf32>
    %24 = arith.select %21, %23, %22 : vector<16x32xi1>, vector<16x32xf32>
    %c15_i32 = arith.constant 15 : i32
    %25 = vector.broadcast %c15_i32 : i32 to vector<16x32xi32>
    %26 = arith.cmpi eq, %19, %25 : vector<16x32xi32>
    %c15_i32_19 = arith.constant 15 : i32
    %27 = tpu.dynamic_rotate %18 by %c15_i32_19 dim 0 : vector<16x32xf32>, i32 -> vector<16x32xf32>
    %cst_20 = arith.constant 0.000000e+00 : f32
    %28 = vector.broadcast %cst_20 : f32 to vector<16x32xf32>
    %29 = arith.select %26, %28, %27 : vector<16x32xi1>, vector<16x32xf32>
    %30 = arith.addf %15, %24 : vector<16x32xf32>
    %31 = arith.addf %30, %29 : vector<16x32xf32>
    %32 = vector.broadcast %8 : vector<1x32xf32> to vector<16x32xf32>
    %33 = arith.addf %31, %32 : vector<16x32xf32>
    %c0_21 = arith.constant 0 : index
    %c0_22 = arith.constant 0 : index
    %34 = vector.load %arg5[%c0_21, %c0_22] : memref<1x32xf32, #tpu.memory_space<vmem>>, vector<1x32xf32>
    %35 = arith.truncf %7 : vector<16x4xf32> to vector<16x4xbf16>
    %c0_23 = arith.constant 0 : index
    %c0_24 = arith.constant 0 : index
    %c0_25 = arith.constant 0 : index
    %36 = vector.load %arg4[%c0_23, %c0_24, %c0_25] : memref<3x4x32xbf16, #tpu.memory_space<vmem>>, vector<1x4x32xbf16>
    %37 = vector.shape_cast %36 : vector<1x4x32xbf16> to vector<4x32xbf16>
    %cst_26 = arith.constant dense<0.000000e+00> : vector<16x32xf32>
    %38 = tpu.matmul %35, %37, %cst_26 {dimension_numbers = #tpu.dot_dimension_numbers<[1], [0], [0], [1], [0, 0, 1, 1], [], []>} : vector<16x4xbf16>, vector<4x32xbf16>, vector<16x32xf32> -> vector<16x32xf32>
    %c1_27 = arith.constant 1 : index
    %c0_28 = arith.constant 0 : index
    %c0_29 = arith.constant 0 : index
    %39 = vector.load %arg4[%c1_27, %c0_28, %c0_29] : memref<3x4x32xbf16, #tpu.memory_space<vmem>>, vector<1x4x32xbf16>
    %40 = vector.shape_cast %39 : vector<1x4x32xbf16> to vector<4x32xbf16>
    %cst_30 = arith.constant dense<0.000000e+00> : vector<16x32xf32>
    %41 = tpu.matmul %35, %40, %cst_30 {dimension_numbers = #tpu.dot_dimension_numbers<[1], [0], [0], [1], [0, 0, 1, 1], [], []>} : vector<16x4xbf16>, vector<4x32xbf16>, vector<16x32xf32> -> vector<16x32xf32>
    %c2_31 = arith.constant 2 : index
    %c0_32 = arith.constant 0 : index
    %c0_33 = arith.constant 0 : index
    %42 = vector.load %arg4[%c2_31, %c0_32, %c0_33] : memref<3x4x32xbf16, #tpu.memory_space<vmem>>, vector<1x4x32xbf16>
    %43 = vector.shape_cast %42 : vector<1x4x32xbf16> to vector<4x32xbf16>
    %cst_34 = arith.constant dense<0.000000e+00> : vector<16x32xf32>
    %44 = tpu.matmul %35, %43, %cst_34 {dimension_numbers = #tpu.dot_dimension_numbers<[1], [0], [0], [1], [0, 0, 1, 1], [], []>} : vector<16x4xbf16>, vector<4x32xbf16>, vector<16x32xf32> -> vector<16x32xf32>
    %45 = tpu.iota {dimensions = array<i32: 0>} : vector<16x32xi32>
    %c0_i32_35 = arith.constant 0 : i32
    %46 = vector.broadcast %c0_i32_35 : i32 to vector<16x32xi32>
    %47 = arith.cmpi eq, %45, %46 : vector<16x32xi32>
    %c1_i32_36 = arith.constant 1 : i32
    %48 = tpu.dynamic_rotate %38 by %c1_i32_36 dim 0 : vector<16x32xf32>, i32 -> vector<16x32xf32>
    %cst_37 = arith.constant 0.000000e+00 : f32
    %49 = vector.broadcast %cst_37 : f32 to vector<16x32xf32>
    %50 = arith.select %47, %49, %48 : vector<16x32xi1>, vector<16x32xf32>
    %c15_i32_38 = arith.constant 15 : i32
    %51 = vector.broadcast %c15_i32_38 : i32 to vector<16x32xi32>
    %52 = arith.cmpi eq, %45, %51 : vector<16x32xi32>
    %c15_i32_39 = arith.constant 15 : i32
    %53 = tpu.dynamic_rotate %44 by %c15_i32_39 dim 0 : vector<16x32xf32>, i32 -> vector<16x32xf32>
    %cst_40 = arith.constant 0.000000e+00 : f32
    %54 = vector.broadcast %cst_40 : f32 to vector<16x32xf32>
    %55 = arith.select %52, %54, %53 : vector<16x32xi1>, vector<16x32xf32>
    %56 = arith.addf %41, %50 : vector<16x32xf32>
    %57 = arith.addf %56, %55 : vector<16x32xf32>
    %58 = vector.broadcast %34 : vector<1x32xf32> to vector<16x32xf32>
    %59 = arith.addf %57, %58 : vector<16x32xf32>
    %60 = vector.shape_cast %33 : vector<16x32xf32> to vector<8x2x32xf32>
    %cst_41 = arith.constant dense<0xFF800000> : vector<8x32xf32>
    %61 = vector.multi_reduction <maximumf>, %60, %cst_41 [1] : vector<8x2x32xf32> to vector<8x32xf32>
    %c0_42 = arith.constant 0 : index
    %c0_43 = arith.constant 0 : index
    %c0_44 = arith.constant 0 : index
    %62 = vector.load %arg6[%c0_42, %c0_43, %c0_44] : memref<1x8x32xf32, #tpu.memory_space<vmem>>, vector<1x8x32xf32>
    %63 = vector.shape_cast %62 : vector<1x8x32xf32> to vector<8x32xf32>
    %64 = vector.shape_cast %61 : vector<8x32xf32> to vector<1x8x32xf32>
    tpu.vector_store %arg6[%c0_42, %c0_43, %c0_44], %64 {strides = array<i32>} : memref<1x8x32xf32, #tpu.memory_space<vmem>>, vector<1x8x32xf32>,
    %65 = vector.shape_cast %59 : vector<16x32xf32> to vector<8x2x32xf32>
    %cst_45 = arith.constant dense<0xFF800000> : vector<8x32xf32>
    %66 = vector.multi_reduction <maximumf>, %65, %cst_45 [1] : vector<8x2x32xf32> to vector<8x32xf32>
    %c0_46 = arith.constant 0 : index
    %c0_47 = arith.constant 0 : index
    %c0_48 = arith.constant 0 : index
    %67 = vector.load %arg7[%c0_46, %c0_47, %c0_48] : memref<1x8x32xf32, #tpu.memory_space<vmem>>, vector<1x8x32xf32>
    %68 = vector.shape_cast %67 : vector<1x8x32xf32> to vector<8x32xf32>
    %69 = vector.shape_cast %66 : vector<8x32xf32> to vector<1x8x32xf32>
    tpu.vector_store %arg7[%c0_46, %c0_47, %c0_48], %69 {strides = array<i32>} : memref<1x8x32xf32, #tpu.memory_space<vmem>>, vector<1x8x32xf32>,
    return
  }
  func.func @transform_0(%arg0: i32) -> (i32, i32, i32, i32) {
    %c0_i32 = arith.constant 0 : i32
    %c0_i32_0 = arith.constant 0 : i32
    %c0_i32_1 = arith.constant 0 : i32
    %c0_i32_2 = arith.constant 0 : i32
    return %arg0, %c0_i32, %c0_i32_0, %c0_i32_1 : i32, i32, i32, i32
  }
  func.func @transform_1(%arg0: i32) -> (i32, i32, i32) {
    %c0_i32 = arith.constant 0 : i32
    %c0_i32_0 = arith.constant 0 : i32
    %c0_i32_1 = arith.constant 0 : i32
    %c0_i32_2 = arith.constant 0 : i32
    return %c0_i32, %c0_i32_0, %c0_i32_1 : i32, i32, i32
  }
  func.func @transform_2(%arg0: i32) -> (i32, i32) {
    %c0_i32 = arith.constant 0 : i32
    %c0_i32_0 = arith.constant 0 : i32
    %c0_i32_1 = arith.constant 0 : i32
    return %c0_i32, %c0_i32_0 : i32, i32
  }
  func.func @transform_3(%arg0: i32) -> (i32, i32, i32) {
    %c0_i32 = arith.constant 0 : i32
    %c0_i32_0 = arith.constant 0 : i32
    %c0_i32_1 = arith.constant 0 : i32
    %c0_i32_2 = arith.constant 0 : i32
    return %c0_i32, %c0_i32_0, %c0_i32_1 : i32, i32, i32
  }
  func.func @transform_4(%arg0: i32) -> (i32, i32) {
    %c0_i32 = arith.constant 0 : i32
    %c0_i32_0 = arith.constant 0 : i32
    %c0_i32_1 = arith.constant 0 : i32
    return %c0_i32, %c0_i32_0 : i32, i32
  }
  func.func @transform_5(%arg0: i32) -> (i32, i32, i32) {
    %c0_i32 = arith.constant 0 : i32
    %c0_i32_0 = arith.constant 0 : i32
    %c0_i32_1 = arith.constant 0 : i32
    return %arg0, %c0_i32, %c0_i32_0 : i32, i32, i32
  }
  func.func @transform_6(%arg0: i32) -> (i32, i32, i32) {
    %c0_i32 = arith.constant 0 : i32
    %c0_i32_0 = arith.constant 0 : i32
    %c0_i32_1 = arith.constant 0 : i32
    return %arg0, %c0_i32, %c0_i32_0 : i32, i32, i32
  }
}

module attributes {stable_mosaic.version = 11 : i64} {
  func.func @_gate_kernel(%arg0: i32, %arg1: i32, %arg2: memref<1x8x32xf32, #tpu.memory_space<vmem>>, %arg3: memref<1x8x32xf32, #tpu.memory_space<vmem>>, %arg4: memref<32x32xbf16, #tpu.memory_space<vmem>>, %arg5: memref<1x32xf32, #tpu.memory_space<vmem>>, %arg6: memref<1x8x8x32xf32, #tpu.memory_space<vmem>>) attributes {dimension_semantics = [#tpu.dimension_semantics<parallel>, #tpu.dimension_semantics<parallel>], iteration_bounds = array<i64: 2, 1>, scalar_prefetch = 0 : i64, scratch_operands = 0 : i64, tpu.core_type = #tpu.core_type<tc>, window_params = [{transform_indices = @transform_0, window_bounds = array<i64: 1, 8, 32>}, {transform_indices = @transform_1, window_bounds = array<i64: 1, 8, 32>}, {pipeline_mode = #tpu.pipeline_mode<synchronous>, transform_indices = @transform_2, window_bounds = array<i64: 32, 32>}, {pipeline_mode = #tpu.pipeline_mode<synchronous>, transform_indices = @transform_3, window_bounds = array<i64: 1, 32>}, {transform_indices = @transform_4, window_bounds = array<i64: 1, 8, 8, 32>}]} {
    %c0 = arith.constant 0 : index
    %c0_0 = arith.constant 0 : index
    %c0_1 = arith.constant 0 : index
    %0 = vector.load %arg2[%c0, %c0_0, %c0_1] : memref<1x8x32xf32, #tpu.memory_space<vmem>>, vector<1x8x32xf32>
    %1 = vector.shape_cast %0 : vector<1x8x32xf32> to vector<8x32xf32>
    %c0_2 = arith.constant 0 : index
    %c0_3 = arith.constant 0 : index
    %c0_4 = arith.constant 0 : index
    %2 = vector.load %arg3[%c0_2, %c0_3, %c0_4] : memref<1x8x32xf32, #tpu.memory_space<vmem>>, vector<1x8x32xf32>
    %3 = vector.shape_cast %2 : vector<1x8x32xf32> to vector<8x32xf32>
    %4 = vector.shape_cast %1 : vector<8x32xf32> to vector<8x1x32xf32>
    %5 = vector.shape_cast %3 : vector<8x32xf32> to vector<1x8x32xf32>
    %6 = vector.broadcast %4 : vector<8x1x32xf32> to vector<8x8x32xf32>
    %7 = vector.broadcast %5 : vector<1x8x32xf32> to vector<8x8x32xf32>
    %8 = arith.addf %6, %7 : vector<8x8x32xf32>
    %cst = arith.constant 0.000000e+00 : f32
    %9 = vector.broadcast %cst : f32 to vector<8x8x32xf32>
    %10 = arith.maximumf %8, %9 : vector<8x8x32xf32>
    %11 = vector.shape_cast %10 : vector<8x8x32xf32> to vector<64x32xf32>
    %12 = arith.truncf %11 : vector<64x32xf32> to vector<64x32xbf16>
    %c0_5 = arith.constant 0 : index
    %c0_6 = arith.constant 0 : index
    %13 = vector.load %arg4[%c0_5, %c0_6] : memref<32x32xbf16, #tpu.memory_space<vmem>>, vector<32x32xbf16>
    %cst_7 = arith.constant dense<0.000000e+00> : vector<64x32xf32>
    %14 = tpu.matmul %12, %13, %cst_7 {dimension_numbers = #tpu.dot_dimension_numbers<[1], [0], [0], [1], [0, 0, 1, 1], [], []>} : vector<64x32xbf16>, vector<32x32xbf16>, vector<64x32xf32> -> vector<64x32xf32>
    %c0_8 = arith.constant 0 : index
    %c0_9 = arith.constant 0 : index
    %15 = vector.load %arg5[%c0_8, %c0_9] : memref<1x32xf32, #tpu.memory_space<vmem>>, vector<1x32xf32>
    %16 = vector.broadcast %15 : vector<1x32xf32> to vector<64x32xf32>
    %17 = arith.addf %14, %16 : vector<64x32xf32>
    %cst_10 = arith.constant 0.000000e+00 : f32
    %18 = vector.broadcast %cst_10 : f32 to vector<64x32xf32>
    %19 = arith.subf %18, %17 : vector<64x32xf32>
    %20 = math.exp %19 : vector<64x32xf32>
    %cst_11 = arith.constant 1.000000e+00 : f32
    %21 = vector.broadcast %cst_11 : f32 to vector<64x32xf32>
    %22 = arith.addf %21, %20 : vector<64x32xf32>
    %23 = tpu.reciprocal %22 {approx = true} : vector<64x32xf32> -> vector<64x32xf32>
    %24 = vector.shape_cast %23 : vector<64x32xf32> to vector<8x8x32xf32>
    %c0_12 = arith.constant 0 : index
    %c0_13 = arith.constant 0 : index
    %c0_14 = arith.constant 0 : index
    %c0_15 = arith.constant 0 : index
    %25 = vector.load %arg6[%c0_12, %c0_13, %c0_14, %c0_15] : memref<1x8x8x32xf32, #tpu.memory_space<vmem>>, vector<1x8x8x32xf32>
    %26 = vector.shape_cast %25 : vector<1x8x8x32xf32> to vector<8x8x32xf32>
    %27 = vector.shape_cast %24 : vector<8x8x32xf32> to vector<1x8x8x32xf32>
    tpu.vector_store %arg6[%c0_12, %c0_13, %c0_14, %c0_15], %27 {strides = array<i32>} : memref<1x8x8x32xf32, #tpu.memory_space<vmem>>, vector<1x8x8x32xf32>,
    return
  }
  func.func @transform_0(%arg0: i32, %arg1: i32) -> (i32, i32, i32) {
    %c0_i32 = arith.constant 0 : i32
    %c0_i32_0 = arith.constant 0 : i32
    return %arg0, %arg1, %c0_i32 : i32, i32, i32
  }
  func.func @transform_1(%arg0: i32, %arg1: i32) -> (i32, i32, i32) {
    %c0_i32 = arith.constant 0 : i32
    %c0_i32_0 = arith.constant 0 : i32
    %c0_i32_1 = arith.constant 0 : i32
    return %arg0, %c0_i32, %c0_i32_0 : i32, i32, i32
  }
  func.func @transform_2(%arg0: i32, %arg1: i32) -> (i32, i32) {
    %c0_i32 = arith.constant 0 : i32
    %c0_i32_0 = arith.constant 0 : i32
    %c0_i32_1 = arith.constant 0 : i32
    return %c0_i32, %c0_i32_0 : i32, i32
  }
  func.func @transform_3(%arg0: i32, %arg1: i32) -> (i32, i32) {
    %c0_i32 = arith.constant 0 : i32
    %c0_i32_0 = arith.constant 0 : i32
    %c0_i32_1 = arith.constant 0 : i32
    return %c0_i32, %c0_i32_0 : i32, i32
  }
  func.func @transform_4(%arg0: i32, %arg1: i32) -> (i32, i32, i32, i32) {
    %c0_i32 = arith.constant 0 : i32
    %c0_i32_0 = arith.constant 0 : i32
    %c0_i32_1 = arith.constant 0 : i32
    return %arg0, %arg1, %c0_i32, %c0_i32_0 : i32, i32, i32, i32
  }
}

</mosaic_0001>

<llo_original>
// kernel: sp_block_v1_forward.3
$region0: #{sp_block_v1_forward.3}
  #allocation0 [shape = 'u32[]', space=smem, size = 0x4, offset = 0x4, fixed_abs, tag = 'smem constant byte address 0x4 - core index']
  #allocation1 [shape = 'u32[144,128]{1,0:T(1,128)}', space=vmem, size = 0x12000, scoped, tag = 'internal scratch']
  %s0 = inlined_call_operand.vmem [shape: f32[2,8,32], index: 0, kind: input, shape index: {}]
  %s1 = inlined_call_operand.vmem [shape: f32[2,8,32], index: 1, kind: input, shape index: {}]
  %s2 = inlined_call_operand.vmem [shape: bf16[32,32], index: 2, kind: input, shape index: {}]
  %s3 = inlined_call_operand.vmem [shape: f32[1,32], index: 3, kind: input, shape index: {}]
  %s4 = inlined_call_operand.hbm [shape: f32[2,8,8,32], index: 4, kind: output, shape index: {}]
  %s5 = sld [smem:[#allocation0]]
  $region49: #{sp_block_v1_forward.3} parent=0
    _
  %s7 = ssub.s32 1, %s5
  %s8 = scalar_select 0, %s7, %s5
  $region1: #{sp_block_v1_forward.3} parent=0
    #allocation2 [shape = 'u8[65536]{0}', space=vmem, size = 0x10000, scoped, tag = 'output window, operand 0']
    #allocation3 [shape = 's32[2]{0}', space=sflag, size = 0x8, scoped, tag = 'scoped memory for sp_block_v1_forward.3']
    %9 = vsyncpa [#allocation3], 0
    %s10 = scalar_lea.sflag [#allocation3], 1
    %11 = vsyncpa %s10, 0
    loop: start=0, step=1, limit=4
    $region2: #{sp_block_v1_forward.3} parent=1 // loop_pre_header
      _
    $region3: #{sp_block_v1_forward.3} parent=1 // loop_header
      %s13 = sphi 0, %s17
      %p14 = scmp.ge.s32.totalorder %s13, 4
      %s20 = sphi 0, %s32
      %s21 = sphi 0, %s28
      %s22 = sphi 0, %s20
      %s23 = sphi 0, %s21
      %s24 = sphi 0, %s22
      %s25 = sphi 0, %s23
      %s37 = sphi 0, %s39
      %s40 = sphi 0, %s37
      %s41 = sphi 0, %s40
      %s57 = sphi 0, %s41
      %s63 = sphi 0, %s65
      %s66 = sphi 0, %s63
      %s67 = sphi 0, %s66
      %s83 = sphi 0, %s67
      %s87 = sphi 0, %s87
      %s89 = sphi 0, %s87
      %s90 = sphi 0, %s89
      %s104 = sphi 0, %s90
      %s108 = sphi 0, %s108
      %s110 = sphi 0, %s108
      %s111 = sphi 0, %s110
      %s125 = sphi 0, %s111
      %s133 = sphi 0, %s135
      %s136 = sphi 0, %s133
      %s137 = sphi 0, %s136
      %s153 = sphi 0, %s137
    $region4: #{sp_block_v1_forward.3} parent=1 // loop_header_branch
      %16 = sbr.rel (%p14) target = $region8
    $region5: #{sp_block_v1_forward.3} parent=1 // loop_body
      %s18 = ssub.s32 %s13, 1
      %s19 = ssub.s32 %s13, 2
      %s26 = sadd.s32 1, %s21
      %p27 = scmp.ge.s32.totalorder %s26, 1
      %s28 = scalar_select %p27, 0, %s26
      %s29 = sadd.s32 1, %s20
      %s30 = scalar_select %p27, %s29, %s20
      %p31 = scmp.ge.s32.totalorder %s30, 2
      %s32 = scalar_select %p31, 0, %s30
      %s33 = ssub.s32 %s20, %s32
      %s34 = ssub.s32 %s21, %s28
      %s35 = sor.u32 %s33, %s34
      %p36 = scmp.eq.s32.totalorder %s35, 0
      %s38 = sadd.s32 %s37, 1
      %s39 = scalar_select %p36, %s37, %s38
      %p42 = pneg %p36
      %p43 = scmp.eq.s32.totalorder %s13, 1
      %p44 = por %p42, %p43
      %p45 = scmp.ne.s32.totalorder %s37, %s40
      %p46 = scmp.eq.s32.totalorder %s13, 0
      %p47 = por %p45, %p46
      %p48 = scmp.ne.s32.totalorder %s37, %s40
      %p49 = scmp.eq.s32.totalorder %s18, 1
      %p50 = por %p48, %p49
      %p51 = scmp.ne.s32.totalorder %s40, %s41
      %p52 = scmp.eq.s32.totalorder %s18, 0
      %p53 = por %p51, %p52
      %p54 = scmp.ne.s32.totalorder %s40, %s41
      %p55 = scmp.eq.s32.totalorder %s19, 1
      %p56 = por %p54, %p55
      %p58 = scmp.ne.s32.totalorder %s41, %s57
      %p59 = scmp.eq.s32.totalorder %s19, 0
      %p60 = por %p58, %p59
      %s61 = ssub.s32 %s20, %s32
      %p62 = scmp.eq.s32.totalorder %s61, 0
      %s64 = sadd.s32 %s63, 1
      %s65 = scalar_select %p62, %s63, %s64
      %p68 = pneg %p62
      %p69 = scmp.eq.s32.totalorder %s13, 1
      %p70 = por %p68, %p69
      %p71 = scmp.ne.s32.totalorder %s63, %s66
      %p72 = scmp.eq.s32.totalorder %s13, 0
      %p73 = por %p71, %p72
      %p74 = scmp.ne.s32.totalorder %s63, %s66
      %p75 = scmp.eq.s32.totalorder %s18, 1
      %p76 = por %p74, %p75
      %p77 = scmp.ne.s32.totalorder %s66, %s67
      %p78 = scmp.eq.s32.totalorder %s18, 0
      %p79 = por %p77, %p78
      %p80 = scmp.ne.s32.totalorder %s66, %s67
      %p81 = scmp.eq.s32.totalorder %s19, 1
      %p82 = por %p80, %p81
      %p84 = scmp.ne.s32.totalorder %s67, %s83
      %p85 = scmp.eq.s32.totalorder %s19, 0
      %p86 = por %p84, %p85
      %s88 = sadd.s32 %s87, 1
      %p91 = scmp.eq.s32.totalorder %s13, 1
      %p92 = scmp.ne.s32.totalorder %s87, %s89
      %p93 = scmp.eq.s32.totalorder %s13, 0
      %p94 = por %p92, %p93
      %p95 = scmp.ne.s32.totalorder %s87, %s89
      %p96 = scmp.eq.s32.totalorder %s18, 1
      %p97 = por %p95, %p96
      %p98 = scmp.ne.s32.totalorder %s89, %s90
      %p99 = scmp.eq.s32.totalorder %s18, 0
      %p100 = por %p98, %p99
      %p101 = scmp.ne.s32.totalorder %s89, %s90
      %p102 = scmp.eq.s32.totalorder %s19, 1
      %p103 = por %p101, %p102
      %p105 = scmp.ne.s32.totalorder %s90, %s104
      %p106 = scmp.eq.s32.totalorder %s19, 0
      %p107 = por %p105, %p106
      %s109 = sadd.s32 %s108, 1
      %p112 = scmp.eq.s32.totalorder %s13, 1
      %p113 = scmp.ne.s32.totalorder %s108, %s110
      %p114 = scmp.eq.s32.totalorder %s13, 0
      %p115 = por %p113, %p114
      %p116 = scmp.ne.s32.totalorder %s108, %s110
      %p117 = scmp.eq.s32.totalorder %s18, 1
      %p118 = por %p116, %p117
      %p119 = scmp.ne.s32.totalorder %s110, %s111
      %p120 = scmp.eq.s32.totalorder %s18, 0
      %p121 = por %p119, %p120
      %p122 = scmp.ne.s32.totalorder %s110, %s111
      %p123 = scmp.eq.s32.totalorder %s19, 1
      %p124 = por %p122, %p123
      %p126 = scmp.ne.s32.totalorder %s111, %s125
      %p127 = scmp.eq.s32.totalorder %s19, 0
      %p128 = por %p126, %p127
      %s129 = ssub.s32 %s20, %s32
      %s130 = ssub.s32 %s21, %s28
      %s131 = sor.u32 %s129, %s130
      %p132 = scmp.eq.s32.totalorder %s131, 0
      %s134 = sadd.s32 %s133, 1
      %s135 = scalar_select %p132, %s133, %s134
      %p138 = pneg %p132
      %p139 = scmp.eq.s32.totalorder %s13, 1
      %p140 = por %p138, %p139
      %p141 = scmp.ne.s32.totalorder %s133, %s136
      %p142 = scmp.eq.s32.totalorder %s13, 0
      %p143 = por %p141, %p142
      %p144 = scmp.ne.s32.totalorder %s133, %s136
      %p145 = scmp.eq.s32.totalorder %s18, 1
      %p146 = por %p144, %p145
      %p147 = scmp.ne.s32.totalorder %s136, %s137
      %p148 = scmp.eq.s32.totalorder %s18, 0
      %p149 = por %p147, %p148
      %p150 = scmp.ne.s32.totalorder %s136, %s137
      %p151 = scmp.eq.s32.totalorder %s19, 1
      %p152 = por %p150, %p151
      %p154 = scmp.ne.s32.totalorder %s137, %s153
      %p155 = scmp.eq.s32.totalorder %s19, 0
      %p156 = por %p154, %p155
      %p157 = scmp.le.s32.totalorder 1, %s13
      %p158 = scmp.lt.s32.totalorder %s13, 3
      %p159 = pnand %p157, %p158
      %p160 = pneg %p159
      // Predicated region
      $region9: #{sp_block_v1_forward.3} parent=5 // pred_check
        _
      $region10: #{sp_block_v1_forward.3} parent=5 // pred_check_branch
        %162 = sbr.rel (%p159) target = $region12
      $region11: #{sp_block_v1_forward.3} parent=5 // pred_region
        %s163 = ssub.s32 %s13, 1
        // Predicated region
        $region13: #{sp_block_v1_forward.3} parent=11 // pred_check
          %p164 = pneg %p100
        $region14: #{sp_block_v1_forward.3} parent=11 // pred_check_branch
          %166 = sbr.rel (%p164) target = $region16
        $region15: #{sp_block_v1_forward.3} parent=11 // pred_region
          _
        $region16: #{sp_block_v1_forward.3} parent=11 // pred_fallthru
          _
        // Predicated region
        $region17: #{sp_block_v1_forward.3} parent=11 // pred_check
          %p167 = pneg %p121
        $region18: #{sp_block_v1_forward.3} parent=11 // pred_check_branch
          %169 = sbr.rel (%p167) target = $region20
        $region19: #{sp_block_v1_forward.3} parent=11 // pred_region
          _
        $region20: #{sp_block_v1_forward.3} parent=11 // pred_fallthru
          _
      $region12: #{sp_block_v1_forward.3} parent=5 // pred_fallthru
        _
      %p170 = scmp.lt.s32.totalorder %s13, 2
      // Predicated region
      $region21: #{sp_block_v1_forward.3} parent=5 // pred_check
        %p171 = pneg %p170
      $region22: #{sp_block_v1_forward.3} parent=5 // pred_check_branch
        %173 = sbr.rel (%p171) target = $region24
      $region23: #{sp_block_v1_forward.3} parent=5 // pred_region
        // Predicated region
        $region25: #{sp_block_v1_forward.3} parent=23 // pred_check
          %p174 = pneg %p47
        $region26: #{sp_block_v1_forward.3} parent=23 // pred_check_branch
          %176 = sbr.rel (%p174) target = $region28
        $region27: #{sp_block_v1_forward.3} parent=23 // pred_region
          %p177 = scmp.lt.s32.totalorder %s20, 1
          %s178 = scalar_select %p177, %s20, 1
          %p179 = scmp.lt.s32.totalorder %s21, 0
          %s180 = scalar_select %p179, %s21, 0
          %s181 = sadd.s32 %s180, %s178
          %s182 = smul.addr %s181, 8
          %s183 = scalar_lea.vmem %s0, %s182
        $region28: #{sp_block_v1_forward.3} parent=23 // pred_fallthru
          _
        // Predicated region
        $region29: #{sp_block_v1_forward.3} parent=23 // pred_check
          %p184 = pneg %p73
        $region30: #{sp_block_v1_forward.3} parent=23 // pred_check_branch
          %186 = sbr.rel (%p184) target = $region32
        $region31: #{sp_block_v1_forward.3} parent=23 // pred_region
          %p187 = scmp.lt.s32.totalorder %s20, 1
          %s188 = scalar_select %p187, %s20, 1
          %s189 = smul.addr %s188, 8
          %s190 = scalar_lea.vmem %s1, %s189
        $region32: #{sp_block_v1_forward.3} parent=23 // pred_fallthru
          _
      $region24: #{sp_block_v1_forward.3} parent=5 // pred_fallthru
        _
      %p191 = scmp.le.s32.totalorder 1, %s13
      %p192 = scmp.lt.s32.totalorder %s13, 3
      %p193 = pnand %p191, %p192
      %p194 = pneg %p193
      // Predicated region
      $region33: #{sp_block_v1_forward.3} parent=5 // pred_check
        _
      $region34: #{sp_block_v1_forward.3} parent=5 // pred_check_branch
        %196 = sbr.rel (%p193) target = $region36
      $region35: #{sp_block_v1_forward.3} parent=5 // pred_region
        %s197 = ssub.s32 %s13, 1
        %p198 = scmp.lt.s32.totalorder %s22, 1
        %s199 = scalar_select %p198, %s22, 1
        %p200 = scmp.lt.s32.totalorder %s23, 0
        %s201 = scalar_select %p200, %s23, 0
        %s202 = sadd.s32 %s201, %s199
        %s203 = smul.addr %s202, 8
        %s204 = scalar_lea.vmem %s0, %s203
        %p205 = pneg %p53
        %p206 = pneg %p50
        %p207 = scmp.lt.s32.totalorder %s22, 1
        %s208 = scalar_select %p207, %s22, 1
        %s209 = smul.addr %s208, 8
        %s210 = scalar_lea.vmem %s1, %s209
        %p211 = pneg %p79
        %p212 = pneg %p76
        %p213 = pneg %p100
        %p214 = pneg %p97
        %p215 = pneg %p121
        %p216 = pneg %p118
        %p217 = pneg %p149
        %p218 = pneg %p146
        %s219 = sand.u32 %s136, 1
        %s220 = scalar_lea.sflag [#allocation3], %s219
        %s221 = sand.u32 %s136, 1
        %s222 = smul.addr %s221, 64
        %s223 = scalar_lea.vmem [#allocation2], %s222
        %p224 = scmp.lt.s32.totalorder %s22, 1
        %s225 = scalar_select %p224, %s22, 1
        %p226 = scmp.lt.s32.totalorder %s23, 0
        %s227 = scalar_select %p226, %s23, 0
        %s228 = sadd.s32 %s227, %s225
        %s229 = smul.addr %s228, 8
        %s230 = scalar_lea.vmem %s0, %s229
        %p231 = scmp.lt.s32.totalorder %s22, 1
        %s232 = scalar_select %p231, %s22, 1
        %s233 = smul.addr %s232, 8
        %s234 = scalar_lea.vmem %s1, %s233
        %s235 = smul.u32 8, %s23
        %v237 = vld [vmem:[%s230] sm:$0xff]
        %v238 = vld [vmem:[%s234] sm:$0xff]
        %v240 = vcombine.high %v237, %v237
        %v242 = vunpack.c.l.s4 1966171168
        %v243 = vunpack.c.0.s8 %v242
        %v244 = vlaneseq
        %v245 = vshrl.u32 %v244, 7
        %v246 = vsub.s32 %v243, %v245
        %v247 = vrot.slane %v237, %v246
        %v249 = vunpack.c.l.s4 1966171168
        %v250 = vunpack.c.0.s8 %v249
        %v251 = vlaneseq
        %v252 = vshrl.u32 %v251, 7
        %v253 = vsub.s32 %v250, %v252
        %v254 = vrot.slane %v240, %v253
        %v255 = vcombine.high %v247, %v247
        %v256 = vcombine.high %v254, %v254
        %v258 = vunpack.c.l.s4 1966171168
        %v259 = vunpack.c.0.s8 %v258
        %v260 = vlaneseq
        %v261 = vshrl.u32 %v260, 7
        %v262 = vsub.s32 %v259, %v261
        %v263 = vrot.slane %v247, %v262
        %v265 = vunpack.c.l.s4 1966171168
        %v266 = vunpack.c.0.s8 %v265
        %v267 = vlaneseq
        %v268 = vshrl.u32 %v267, 7
        %v269 = vsub.s32 %v266, %v268
        %v270 = vrot.slane %v254, %v269
        %v272 = vunpack.c.l.s4 1966171168
        %v273 = vunpack.c.0.s8 %v272
        %v274 = vlaneseq
        %v275 = vshrl.u32 %v274, 7
        %v276 = vsub.s32 %v273, %v275
        %v277 = vrot.slane %v255, %v276
        %v279 = vunpack.c.l.s4 1966171168
        %v280 = vunpack.c.0.s8 %v279
        %v281 = vlaneseq
        %v282 = vshrl.u32 %v281, 7
        %v283 = vsub.s32 %v280, %v282
        %v284 = vrot.slane %v256, %v283
        %v285 = vcombine.high %v263, %v263
        %v286 = vcombine.high %v270, %v270
        %v287 = vcombine.high %v277, %v277
        %v288 = vcombine.high %v284, %v284
        %v289 = vlaneseq
        %v290 = vshrl.u32 %v289, 7
        %v291 = vsub.s32 0, %v290
        %v292 = vrot.slane %v263, %v291
        %v293 = vlaneseq
        %v294 = vshrl.u32 %v293, 7
        %v295 = vsub.s32 0, %v294
        %v296 = vrot.slane %v277, %v295
        %v297 = vlaneseq
        %v298 = vshrl.u32 %v297, 7
        %v299 = vsub.s32 0, %v298
        %v300 = vrot.slane %v285, %v299
        %v301 = vlaneseq
        %v302 = vshrl.u32 %v301, 7
        %v303 = vsub.s32 0, %v302
        %v304 = vrot.slane %v287, %v303
        %v305 = vlaneseq
        %v306 = vshrl.u32 %v305, 7
        %v307 = vsub.s32 0, %v306
        %v308 = vrot.slane %v270, %v307
        %v309 = vlaneseq
        %v310 = vshrl.u32 %v309, 7
        %v311 = vsub.s32 0, %v310
        %v312 = vrot.slane %v284, %v311
        %v313 = vlaneseq
        %v314 = vshrl.u32 %v313, 7
        %v315 = vsub.s32 0, %v314
        %v316 = vrot.slane %v286, %v315
        %v317 = vlaneseq
        %v318 = vshrl.u32 %v317, 7
        %v319 = vsub.s32 0, %v318
        %v320 = vrot.slane %v288, %v319
        %v329 = vadd.f32 %v292, %v238
        %v330 = vadd.f32 %v296, %v238
        %v331 = vadd.f32 %v300, %v238
        %v332 = vadd.f32 %v304, %v238
        %v333 = vadd.f32 %v308, %v238
        %v334 = vadd.f32 %v312, %v238
        %v335 = vadd.f32 %v316, %v238
        %v336 = vadd.f32 %v320, %v238
        %v337 = vmax.f32 %v329, 0.0
        %v338 = vmax.f32 %v330, 0.0
        %v339 = vmax.f32 %v331, 0.0
        %v340 = vmax.f32 %v332, 0.0
        %v341 = vmax.f32 %v333, 0.0
        %v342 = vmax.f32 %v334, 0.0
        %v343 = vmax.f32 %v335, 0.0
        %v344 = vmax.f32 %v336, 0.0
        %v345 = vpack.c.bf16 %v338, %v337
        %v346 = vpack.c.bf16 %v340, %v339
        %v347 = vpack.c.bf16 %v342, %v341
        %v348 = vpack.c.bf16 %v344, %v343
        %v349 = vld [vmem:[%s2] sm:$0xf]
        %v350 = vld [vmem:[%s2 + $0x4] sm:$0xf]
        %v351 = vld [vmem:[%s2 + $0x8] sm:$0xf]
        %v352 = vld [vmem:[%s2 + $0xc] sm:$0xf]
        %v353 = vld [vmem:[%s3] sm:$0x1]
        %v355 = vlaneseq
        %v356 = vshrl.u32 %v355, 7
        %v357 = vsub.s32 0, %v356
        %v358 = vrot.slane %v353, %v357
        %v364 = vunpack.c.l.b16 %v349
        %v365 = vunpack.c.l.b16 %v350
        %v366 = vunpack.c.l.b16 %v351
        %v367 = vunpack.c.l.b16 %v352
        %v368 = vpack.c.b16 %v365, %v364
        %v369 = vpack.c.b16 %v367, %v366
        %vm372 = vcmask 261120
        %v374 = vsel %vm372, %v345, 0
        %v377 = vsel %vm372, %v346, 0
        %v380 = vsel %vm372, %v347, 0
        %v383 = vsel %vm372, %v348, 0
        %385 = vmatprep.subr.bf16.mxu0 0
        %386 = vmatpush1.bf16.msra.mxu0 %v368
        %387 = vmatprep.subr.bf16.mxu0 0
        %388 = vmatpush1.bf16.msra.mxu0 %v369
        %389 = vmatprep.subr.bf16.mxu0 0
        %390 = vmatpush1.bf16.msra.mxu0 0
        %391 = vmatprep.subr.bf16.mxu0 0
        %392 = vmatpush1.bf16.msra.mxu0 0
        %393 = vmatprep.subr.bf16.mxu0 0
        %394 = vmatpush1.bf16.msra.mxu0 0
        %395 = vmatprep.subr.bf16.mxu0 0
        %396 = vmatpush1.bf16.msra.mxu0 0
        %397 = vmatprep.subr.bf16.mxu0 0
        %398 = vmatpush1.bf16.msra.mxu0 0
        %399 = vmatprep.subr.bf16.mxu0 0
        %400 = vmatpush1.bf16.msra.mxu0 0
        %401 = vmatprep.subr.bf16.mxu0 0
        %402 = vmatpush1.bf16.msra.mxu0 0
        %403 = vmatprep.subr.bf16.mxu0 0
        %404 = vmatpush1.bf16.msra.mxu0 0
        %405 = vmatprep.subr.bf16.mxu0 0
        %406 = vmatpush1.bf16.msra.mxu0 0
        %407 = vmatprep.subr.bf16.mxu0 0
        %408 = vmatpush1.bf16.msra.mxu0 0
        %409 = vmatprep.subr.bf16.mxu0 0
        %410 = vmatpush1.bf16.msra.mxu0 0
        %411 = vmatprep.subr.bf16.mxu0 0
        %412 = vmatpush1.bf16.msra.mxu0 0
        %413 = vmatprep.subr.bf16.mxu0 0
        %414 = vmatpush1.bf16.msra.mxu0 0
        %415 = vmatprep.subr.bf16.mxu0 0
        %416 = vmatpush1.bf16.msra.mxu0 0
        %417 = vmatprep.mubr.bf16.mxu0 0
        %418 = vmatmul.mubr.bf16.gmra.mrb[0].mxu0 %v374
        %v419 = vpop.f32.mrb[0].mxu0
        %v420 = vadd.f32 %v358, %v419
        %v421 = vpop.f32.mrb[0].mxu0
        %v422 = vpop.f32.mrb[0].mxu0
        %v423 = vadd.f32 %v358, %v422
        %v424 = vpop.f32.mrb[0].mxu0
        %425 = vmatprep.mubr.bf16.mxu0 0
        %426 = vmatmul.mubr.bf16.gmra.mrb[0].mxu0 %v377
        %v427 = vpop.f32.mrb[0].mxu0
        %v428 = vadd.f32 %v358, %v427
        %v429 = vpop.f32.mrb[0].mxu0
        %v430 = vpop.f32.mrb[0].mxu0
        %v431 = vadd.f32 %v358, %v430
        %v432 = vpop.f32.mrb[0].mxu0
        %433 = vmatprep.mubr.bf16.mxu0 0
        %434 = vmatmul.mubr.bf16.gmra.mrb[0].mxu0 %v380
        %v435 = vpop.f32.mrb[0].mxu0
        %v436 = vadd.f32 %v358, %v435
        %v437 = vpop.f32.mrb[0].mxu0
        %v438 = vpop.f32.mrb[0].mxu0
        %v439 = vadd.f32 %v358, %v438
        %v440 = vpop.f32.mrb[0].mxu0
        %441 = vmatprep.mubr.bf16.mxu0 0
        %442 = vmatmul.mubr.bf16.gmra.mrb[0].mxu0 %v383
        %v443 = vpop.f32.mrb[0].mxu0
        %v444 = vadd.f32 %v358, %v443
        %v445 = vpop.f32.mrb[0].mxu0
        %v446 = vpop.f32.mrb[0].mxu0
        %v447 = vadd.f32 %v358, %v446
        %v448 = vpop.f32.mrb[0].mxu0
        %449 = vdwg.mxu0
        %v450 = vsub.f32 0.0, %v420
        %v451 = vsub.f32 0.0, %v423
        %v452 = vsub.f32 0.0, %v428
        %v453 = vsub.f32 0.0, %v431
        %v454 = vsub.f32 0.0, %v436
        %v455 = vsub.f32 0.0, %v439
        %v456 = vsub.f32 0.0, %v444
        %v457 = vsub.f32 0.0, %v447
        %v458 = vmul.f32 %v450, 1.442695
        %v459 = vpow.pop %v458
        %v460 = vmul.f32 %v451, 1.442695
        %v461 = vpow.pop %v460
        %v462 = vmul.f32 %v452, 1.442695
        %v463 = vpow.pop %v462
        %v464 = vmul.f32 %v453, 1.442695
        %v465 = vpow.pop %v464
        %v466 = vmul.f32 %v454, 1.442695
        %v467 = vpow.pop %v466
        %v468 = vmul.f32 %v455, 1.442695
        %v469 = vpow.pop %v468
        %v470 = vmul.f32 %v456, 1.442695
        %v471 = vpow.pop %v470
        %v472 = vmul.f32 %v457, 1.442695
        %v473 = vpow.pop %v472
        %v474 = vadd.f32 %v459, 1.0
        %v475 = vadd.f32 %v461, 1.0
        %v476 = vadd.f32 %v463, 1.0
        %v477 = vadd.f32 %v465, 1.0
        %v478 = vadd.f32 %v467, 1.0
        %v479 = vadd.f32 %v469, 1.0
        %v480 = vadd.f32 %v471, 1.0
        %v481 = vadd.f32 %v473, 1.0
        %v482 = vrcp.pop %v474
        %v483 = vrcp.pop %v475
        %v484 = vrcp.pop %v476
        %v485 = vrcp.pop %v477
        %v486 = vrcp.pop %v478
        %v487 = vrcp.pop %v479
        %v488 = vrcp.pop %v480
        %v489 = vrcp.pop %v481
        %490 = vst.msk [vmem:[%s223] sm:$0xff] %vm372, %v482
        %491 = vst.msk [vmem:[%s223 + $0x8] sm:$0xff] %vm372, %v483
        %492 = vst.msk [vmem:[%s223 + $0x10] sm:$0xff] %vm372, %v484
        %493 = vst.msk [vmem:[%s223 + $0x18] sm:$0xff] %vm372, %v485
        %494 = vst.msk [vmem:[%s223 + $0x20] sm:$0xff] %vm372, %v486
        %495 = vst.msk [vmem:[%s223 + $0x28] sm:$0xff] %vm372, %v487
        %496 = vst.msk [vmem:[%s223 + $0x30] sm:$0xff] %vm372, %v488
        %497 = vst.msk [vmem:[%s223 + $0x38] sm:$0xff] %vm372, %v489
        %s498 = sand.u32 %s136, 1
        %s499 = scalar_lea.sflag [#allocation3], %s498
        %s500 = sand.u32 %s136, 1
        %s501 = smul.addr %s500, 64
        %s502 = scalar_lea.vmem [#allocation2], %s501
        // Predicated region
        $region37: #{sp_block_v1_forward.3} parent=35 // pred_check
          %p503 = pneg %p146
        $region38: #{sp_block_v1_forward.3} parent=35 // pred_check_branch
          %505 = sbr.rel (%p503) target = $region40
        $region39: #{sp_block_v1_forward.3} parent=35 // pred_region
          %s506 = smul.u32 8, %s23
          %s508 = ssub.s32 1024, 1024
          %509 = vsyncadd %s499, %s508
          %s510 = smul.addr %s22, 8
          %s511 = sadd.s32 %s506, %s510
          %s512 = smul.addr %s511, 128
          %s513 = scalar_lea.hbm %s4, %s512
          %s514 = sshll.u32 %s502, 4
          %s515 = int_to_ptr.vmem [resolvable:$true] %s514
          %520 = dma.vmem_to_hbm [thread:$0]  %s515, 1024, %s513, %s499, 128, 128, 8
        $region40: #{sp_block_v1_forward.3} parent=35 // pred_fallthru
          _
      $region36: #{sp_block_v1_forward.3} parent=5 // pred_fallthru
        _
      %p521 = scmp.le.s32.totalorder 2, %s13
      // Predicated region
      $region41: #{sp_block_v1_forward.3} parent=5 // pred_check
        %p522 = pneg %p521
      $region42: #{sp_block_v1_forward.3} parent=5 // pred_check_branch
        %524 = sbr.rel (%p522) target = $region44
      $region43: #{sp_block_v1_forward.3} parent=5 // pred_region
        %s525 = ssub.s32 %s13, 2
        // Predicated region
        $region45: #{sp_block_v1_forward.3} parent=43 // pred_check
          %p526 = pneg %p152
        $region46: #{sp_block_v1_forward.3} parent=43 // pred_check_branch
          %528 = sbr.rel (%p526) target = $region48
        $region47: #{sp_block_v1_forward.3} parent=43 // pred_region
          %s529 = sand.u32 %s137, 1
          %s530 = scalar_lea.sflag [#allocation3], %s529
          %s531 = sand.u32 %s137, 1
          %s532 = smul.addr %s531, 64
          %s533 = scalar_lea.vmem [#allocation2], %s532
          %534 = dma.done %s530, 1024
        $region48: #{sp_block_v1_forward.3} parent=43 // pred_fallthru
          _
      $region44: #{sp_block_v1_forward.3} parent=5 // pred_fallthru
        _
    $region6: #{sp_block_v1_forward.3} parent=1 // loop_footer
      %s17 = sadd.s32 1, %s13
    $region7: #{sp_block_v1_forward.3} parent=1 // loop_footer_branch
      %12 = sbr.rel target = $region3
    $region8: #{sp_block_v1_forward.3} parent=1 // loop_exit
      _
    %535 = vsyncpa [#allocation3], 1
    %s536 = scalar_lea.sflag [#allocation3], 1
    %537 = vsyncpa %s536, 1

// kernel: sp_block_v1_forward.2
$region0: #{sp_block_v1_forward.2}
  #allocation0 [shape = 'u32[]', space=smem, size = 0x4, offset = 0x4, fixed_abs, tag = 'smem constant byte address 0x4 - core index']
  #allocation1 [shape = 'u32[144,128]{1,0:T(1,128)}', space=vmem, size = 0x12000, scoped, tag = 'internal scratch']
  %s0 = inlined_call_operand.vmem [shape: f32[2,16,16,4], index: 0, kind: input, shape index: {}]
  %s1 = inlined_call_operand.vmem [shape: bf16[3,4,32], index: 1, kind: input, shape index: {}]
  %s2 = inlined_call_operand.vmem [shape: f32[1,32], index: 2, kind: input, shape index: {}]
  %s3 = inlined_call_operand.vmem [shape: bf16[3,4,32], index: 3, kind: input, shape index: {}]
  %s4 = inlined_call_operand.vmem [shape: f32[1,32], index: 4, kind: input, shape index: {}]
  %s5 = inlined_call_operand.vmem [shape: f32[2,8,32], index: 5, kind: output, shape index: {0}]
  %s6 = inlined_call_operand.vmem [shape: f32[2,8,32], index: 6, kind: output, shape index: {1}]
  %7 = xla_tuple %s5, %s6
  %s8 = sld [smem:[#allocation0]]
  $region61: #{sp_block_v1_forward.2} parent=0
    _
  %s10 = ssub.s32 1, %s8
  %s11 = scalar_select 0, %s10, %s8
  loop: start=0, step=1, limit=4
  $region2: #{sp_block_v1_forward.2} parent=0 // loop_pre_header
    _
  $region3: #{sp_block_v1_forward.2} parent=0 // loop_header
    %s13 = sphi 0, %s17
    %p14 = scmp.ge.s32.totalorder %s13, 4
    %s23 = sphi 0, %s25
    %s26 = sphi 0, %s23
    %s27 = sphi 0, %s26
    %s43 = sphi 0, %s27
    %s47 = sphi 0, %s47
    %s49 = sphi 0, %s47
    %s50 = sphi 0, %s49
    %s64 = sphi 0, %s50
    %s68 = sphi 0, %s68
    %s70 = sphi 0, %s68
    %s71 = sphi 0, %s70
    %s85 = sphi 0, %s71
    %s89 = sphi 0, %s89
    %s91 = sphi 0, %s89
    %s92 = sphi 0, %s91
    %s106 = sphi 0, %s92
    %s110 = sphi 0, %s110
    %s112 = sphi 0, %s110
    %s113 = sphi 0, %s112
    %s127 = sphi 0, %s113
    %s133 = sphi 0, %s135
    %s136 = sphi 0, %s133
    %s137 = sphi 0, %s136
    %s153 = sphi 0, %s137
    %s159 = sphi 0, %s161
    %s162 = sphi 0, %s159
    %s163 = sphi 0, %s162
    %s179 = sphi 0, %s163
  $region4: #{sp_block_v1_forward.2} parent=0 // loop_header_branch
    %16 = sbr.rel (%p14) target = $region8
  $region5: #{sp_block_v1_forward.2} parent=0 // loop_body
    %s18 = ssub.s32 %s13, 1
    %s19 = ssub.s32 %s13, 2
    %s20 = sadd.s32 %s13, 1
    %s21 = ssub.s32 %s13, %s20
    %p22 = scmp.eq.s32.totalorder %s21, 0
    %s24 = sadd.s32 %s23, 1
    %s25 = scalar_select %p22, %s23, %s24
    %p28 = pneg %p22
    %p29 = scmp.eq.s32.totalorder %s13, 1
    %p30 = por %p28, %p29
    %p31 = scmp.ne.s32.totalorder %s23, %s26
    %p32 = scmp.eq.s32.totalorder %s13, 0
    %p33 = por %p31, %p32
    %p34 = scmp.ne.s32.totalorder %s23, %s26
    %p35 = scmp.eq.s32.totalorder %s18, 1
    %p36 = por %p34, %p35
    %p37 = scmp.ne.s32.totalorder %s26, %s27
    %p38 = scmp.eq.s32.totalorder %s18, 0
    %p39 = por %p37, %p38
    %p40 = scmp.ne.s32.totalorder %s26, %s27
    %p41 = scmp.eq.s32.totalorder %s19, 1
    %p42 = por %p40, %p41
    %p44 = scmp.ne.s32.totalorder %s27, %s43
    %p45 = scmp.eq.s32.totalorder %s19, 0
    %p46 = por %p44, %p45
    %s48 = sadd.s32 %s47, 1
    %p51 = scmp.eq.s32.totalorder %s13, 1
    %p52 = scmp.ne.s32.totalorder %s47, %s49
    %p53 = scmp.eq.s32.totalorder %s13, 0
    %p54 = por %p52, %p53
    %p55 = scmp.ne.s32.totalorder %s47, %s49
    %p56 = scmp.eq.s32.totalorder %s18, 1
    %p57 = por %p55, %p56
    %p58 = scmp.ne.s32.totalorder %s49, %s50
    %p59 = scmp.eq.s32.totalorder %s18, 0
    %p60 = por %p58, %p59
    %p61 = scmp.ne.s32.totalorder %s49, %s50
    %p62 = scmp.eq.s32.totalorder %s19, 1
    %p63 = por %p61, %p62
    %p65 = scmp.ne.s32.totalorder %s50, %s64
    %p66 = scmp.eq.s32.totalorder %s19, 0
    %p67 = por %p65, %p66
    %s69 = sadd.s32 %s68, 1
    %p72 = scmp.eq.s32.totalorder %s13, 1
    %p73 = scmp.ne.s32.totalorder %s68, %s70
    %p74 = scmp.eq.s32.totalorder %s13, 0
    %p75 = por %p73, %p74
    %p76 = scmp.ne.s32.totalorder %s68, %s70
    %p77 = scmp.eq.s32.totalorder %s18, 1
    %p78 = por %p76, %p77
    %p79 = scmp.ne.s32.totalorder %s70, %s71
    %p80 = scmp.eq.s32.totalorder %s18, 0
    %p81 = por %p79, %p80
    %p82 = scmp.ne.s32.totalorder %s70, %s71
    %p83 = scmp.eq.s32.totalorder %s19, 1
    %p84 = por %p82, %p83
    %p86 = scmp.ne.s32.totalorder %s71, %s85
    %p87 = scmp.eq.s32.totalorder %s19, 0
    %p88 = por %p86, %p87
    %s90 = sadd.s32 %s89, 1
    %p93 = scmp.eq.s32.totalorder %s13, 1
    %p94 = scmp.ne.s32.totalorder %s89, %s91
    %p95 = scmp.eq.s32.totalorder %s13, 0
    %p96 = por %p94, %p95
    %p97 = scmp.ne.s32.totalorder %s89, %s91
    %p98 = scmp.eq.s32.totalorder %s18, 1
    %p99 = por %p97, %p98
    %p100 = scmp.ne.s32.totalorder %s91, %s92
    %p101 = scmp.eq.s32.totalorder %s18, 0
    %p102 = por %p100, %p101
    %p103 = scmp.ne.s32.totalorder %s91, %s92
    %p104 = scmp.eq.s32.totalorder %s19, 1
    %p105 = por %p103, %p104
    %p107 = scmp.ne.s32.totalorder %s92, %s106
    %p108 = scmp.eq.s32.totalorder %s19, 0
    %p109 = por %p107, %p108
    %s111 = sadd.s32 %s110, 1
    %p114 = scmp.eq.s32.totalorder %s13, 1
    %p115 = scmp.ne.s32.totalorder %s110, %s112
    %p116 = scmp.eq.s32.totalorder %s13, 0
    %p117 = por %p115, %p116
    %p118 = scmp.ne.s32.totalorder %s110, %s112
    %p119 = scmp.eq.s32.totalorder %s18, 1
    %p120 = por %p118, %p119
    %p121 = scmp.ne.s32.totalorder %s112, %s113
    %p122 = scmp.eq.s32.totalorder %s18, 0
    %p123 = por %p121, %p122
    %p124 = scmp.ne.s32.totalorder %s112, %s113
    %p125 = scmp.eq.s32.totalorder %s19, 1
    %p126 = por %p124, %p125
    %p128 = scmp.ne.s32.totalorder %s113, %s127
    %p129 = scmp.eq.s32.totalorder %s19, 0
    %p130 = por %p128, %p129
    %s131 = ssub.s32 %s13, %s20
    %p132 = scmp.eq.s32.totalorder %s131, 0
    %s134 = sadd.s32 %s133, 1
    %s135 = scalar_select %p132, %s133, %s134
    %p138 = pneg %p132
    %p139 = scmp.eq.s32.totalorder %s13, 1
    %p140 = por %p138, %p139
    %p141 = scmp.ne.s32.totalorder %s133, %s136
    %p142 = scmp.eq.s32.totalorder %s13, 0
    %p143 = por %p141, %p142
    %p144 = scmp.ne.s32.totalorder %s133, %s136
    %p145 = scmp.eq.s32.totalorder %s18, 1
    %p146 = por %p144, %p145
    %p147 = scmp.ne.s32.totalorder %s136, %s137
    %p148 = scmp.eq.s32.totalorder %s18, 0
    %p149 = por %p147, %p148
    %p150 = scmp.ne.s32.totalorder %s136, %s137
    %p151 = scmp.eq.s32.totalorder %s19, 1
    %p152 = por %p150, %p151
    %p154 = scmp.ne.s32.totalorder %s137, %s153
    %p155 = scmp.eq.s32.totalorder %s19, 0
    %p156 = por %p154, %p155
    %s157 = ssub.s32 %s13, %s20
    %p158 = scmp.eq.s32.totalorder %s157, 0
    %s160 = sadd.s32 %s159, 1
    %s161 = scalar_select %p158, %s159, %s160
    %p164 = pneg %p158
    %p165 = scmp.eq.s32.totalorder %s13, 1
    %p166 = por %p164, %p165
    %p167 = scmp.ne.s32.totalorder %s159, %s162
    %p168 = scmp.eq.s32.totalorder %s13, 0
    %p169 = por %p167, %p168
    %p170 = scmp.ne.s32.totalorder %s159, %s162
    %p171 = scmp.eq.s32.totalorder %s18, 1
    %p172 = por %p170, %p171
    %p173 = scmp.ne.s32.totalorder %s162, %s163
    %p174 = scmp.eq.s32.totalorder %s18, 0
    %p175 = por %p173, %p174
    %p176 = scmp.ne.s32.totalorder %s162, %s163
    %p177 = scmp.eq.s32.totalorder %s19, 1
    %p178 = por %p176, %p177
    %p180 = scmp.ne.s32.totalorder %s163, %s179
    %p181 = scmp.eq.s32.totalorder %s19, 0
    %p182 = por %p180, %p181
    %p183 = scmp.le.s32.totalorder 1, %s13
    %p184 = scmp.lt.s32.totalorder %s13, 3
    %p185 = pnand %p183, %p184
    %p186 = pneg %p185
    // Predicated region
    $region9: #{sp_block_v1_forward.2} parent=5 // pred_check
      _
    $region10: #{sp_block_v1_forward.2} parent=5 // pred_check_branch
      %188 = sbr.rel (%p185) target = $region12
    $region11: #{sp_block_v1_forward.2} parent=5 // pred_region
      %s189 = ssub.s32 %s13, 1
      // Predicated region
      $region13: #{sp_block_v1_forward.2} parent=11 // pred_check
        %p190 = pneg %p60
      $region14: #{sp_block_v1_forward.2} parent=11 // pred_check_branch
        %192 = sbr.rel (%p190) target = $region16
      $region15: #{sp_block_v1_forward.2} parent=11 // pred_region
        _
      $region16: #{sp_block_v1_forward.2} parent=11 // pred_fallthru
        _
      // Predicated region
      $region17: #{sp_block_v1_forward.2} parent=11 // pred_check
        %p193 = pneg %p81
      $region18: #{sp_block_v1_forward.2} parent=11 // pred_check_branch
        %195 = sbr.rel (%p193) target = $region20
      $region19: #{sp_block_v1_forward.2} parent=11 // pred_region
        _
      $region20: #{sp_block_v1_forward.2} parent=11 // pred_fallthru
        _
      // Predicated region
      $region21: #{sp_block_v1_forward.2} parent=11 // pred_check
        %p196 = pneg %p102
      $region22: #{sp_block_v1_forward.2} parent=11 // pred_check_branch
        %198 = sbr.rel (%p196) target = $region24
      $region23: #{sp_block_v1_forward.2} parent=11 // pred_region
        _
      $region24: #{sp_block_v1_forward.2} parent=11 // pred_fallthru
        _
      // Predicated region
      $region25: #{sp_block_v1_forward.2} parent=11 // pred_check
        %p199 = pneg %p123
      $region26: #{sp_block_v1_forward.2} parent=11 // pred_check_branch
        %201 = sbr.rel (%p199) target = $region28
      $region27: #{sp_block_v1_forward.2} parent=11 // pred_region
        _
      $region28: #{sp_block_v1_forward.2} parent=11 // pred_fallthru
        _
    $region12: #{sp_block_v1_forward.2} parent=5 // pred_fallthru
      _
    %p202 = scmp.lt.s32.totalorder %s13, 2
    // Predicated region
    $region29: #{sp_block_v1_forward.2} parent=5 // pred_check
      %p203 = pneg %p202
    $region30: #{sp_block_v1_forward.2} parent=5 // pred_check_branch
      %205 = sbr.rel (%p203) target = $region32
    $region31: #{sp_block_v1_forward.2} parent=5 // pred_region
      // Predicated region
      $region33: #{sp_block_v1_forward.2} parent=31 // pred_check
        %p206 = pneg %p33
      $region34: #{sp_block_v1_forward.2} parent=31 // pred_check_branch
        %208 = sbr.rel (%p206) target = $region36
      $region35: #{sp_block_v1_forward.2} parent=31 // pred_region
        %p209 = scmp.lt.s32.totalorder %s13, 1
        %s210 = scalar_select %p209, %s13, 1
        %s211 = smul.addr %s210, 32
        %s212 = smul.addr %s211, 8
        %s213 = scalar_lea.vmem %s0, %s212
      $region36: #{sp_block_v1_forward.2} parent=31 // pred_fallthru
        _
    $region32: #{sp_block_v1_forward.2} parent=5 // pred_fallthru
      _
    %p214 = scmp.le.s32.totalorder 1, %s13
    %p215 = scmp.lt.s32.totalorder %s13, 3
    %p216 = pnand %p214, %p215
    %p217 = pneg %p216
    // Predicated region
    $region37: #{sp_block_v1_forward.2} parent=5 // pred_check
      _
    $region38: #{sp_block_v1_forward.2} parent=5 // pred_check_branch
      %219 = sbr.rel (%p216) target = $region40
    $region39: #{sp_block_v1_forward.2} parent=5 // pred_region
      %s220 = ssub.s32 %s13, 1
      %p221 = scmp.lt.s32.totalorder %s18, 1
      %s222 = scalar_select %p221, %s18, 1
      %s223 = smul.addr %s222, 32
      %s224 = smul.addr %s223, 8
      %s225 = scalar_lea.vmem %s0, %s224
      %p226 = pneg %p39
      %p227 = pneg %p36
      %p228 = pneg %p60
      %p229 = pneg %p57
      %p230 = pneg %p81
      %p231 = pneg %p78
      %p232 = pneg %p102
      %p233 = pneg %p99
      %p234 = pneg %p123
      %p235 = pneg %p120
      %p236 = pneg %p149
      %p237 = pneg %p146
      %p238 = scmp.lt.s32.totalorder %s18, 1
      %s239 = scalar_select %p238, %s18, 1
      %s240 = smul.addr %s239, 8
      %s241 = scalar_lea.vmem %s5, %s240
      %p242 = pneg %p175
      %p243 = pneg %p172
      %p244 = scmp.lt.s32.totalorder %s18, 1
      %s245 = scalar_select %p244, %s18, 1
      %s246 = smul.addr %s245, 8
      %s247 = scalar_lea.vmem %s6, %s246
      %p248 = scmp.lt.s32.totalorder %s18, 1
      %s249 = scalar_select %p248, %s18, 1
      %s250 = smul.addr %s249, 32
      %s251 = smul.addr %s250, 8
      %s252 = scalar_lea.vmem %s0, %s251
      %p253 = scmp.lt.s32.totalorder %s18, 1
      %s254 = scalar_select %p253, %s18, 1
      %s255 = smul.addr %s254, 8
      %s256 = scalar_lea.vmem %s5, %s255
      %p257 = scmp.lt.s32.totalorder %s18, 1
      %s258 = scalar_select %p257, %s18, 1
      %s259 = smul.addr %s258, 8
      %s260 = scalar_lea.vmem %s6, %s259
      %v262 = vld [vmem:[%s252] sm:$0xff]
      %v263 = vld [vmem:[%s252 + $0x8] sm:$0xff]
      %v264 = vld [vmem:[%s252 + $0x10] sm:$0xff]
      %v265 = vld [vmem:[%s252 + $0x18] sm:$0xff]
      %v266 = vld [vmem:[%s252 + $0x20] sm:$0xff]
      %v267 = vld [vmem:[%s252 + $0x28] sm:$0xff]
      %v268 = vld [vmem:[%s252 + $0x30] sm:$0xff]
      %v269 = vld [vmem:[%s252 + $0x38] sm:$0xff]
      %v270 = vld [vmem:[%s252 + $0x40] sm:$0xff]
      %v271 = vld [vmem:[%s252 + $0x48] sm:$0xff]
      %v272 = vld [vmem:[%s252 + $0x50] sm:$0xff]
      %v273 = vld [vmem:[%s252 + $0x58] sm:$0xff]
      %v274 = vld [vmem:[%s252 + $0x60] sm:$0xff]
      %v275 = vld [vmem:[%s252 + $0x68] sm:$0xff]
      %v276 = vld [vmem:[%s252 + $0x70] sm:$0xff]
      %v277 = vld [vmem:[%s252 + $0x78] sm:$0xff]
      %v278 = vld [vmem:[%s252 + $0x80] sm:$0xff]
      %v279 = vld [vmem:[%s252 + $0x88] sm:$0xff]
      %v280 = vld [vmem:[%s252 + $0x90] sm:$0xff]
      %v281 = vld [vmem:[%s252 + $0x98] sm:$0xff]
      %v282 = vld [vmem:[%s252 + $0xa0] sm:$0xff]
      %v283 = vld [vmem:[%s252 + $0xa8] sm:$0xff]
      %v284 = vld [vmem:[%s252 + $0xb0] sm:$0xff]
      %v285 = vld [vmem:[%s252 + $0xb8] sm:$0xff]
      %v286 = vld [vmem:[%s252 + $0xc0] sm:$0xff]
      %v287 = vld [vmem:[%s252 + $0xc8] sm:$0xff]
      %v288 = vld [vmem:[%s252 + $0xd0] sm:$0xff]
      %v289 = vld [vmem:[%s252 + $0xd8] sm:$0xff]
      %v290 = vld [vmem:[%s252 + $0xe0] sm:$0xff]
      %v291 = vld [vmem:[%s252 + $0xe8] sm:$0xff]
      %v292 = vld [vmem:[%s252 + $0xf0] sm:$0xff]
      %v293 = vld [vmem:[%s252 + $0xf8] sm:$0xff]
      %vm294 = vcmask 31744
      %v295 = vsel %vm294, %v262, 0.0
      %v296 = vsel %vm294, %v263, 0.0
      %v297 = vadd.f32 %v295, %v296
      %v298 = vrot.slane %v297, 4
      %v299 = vadd.f32 %v297, %v298
      %v300 = vrot.slane %v299, 2
      %v301 = vadd.f32 %v299, %v300
      %v302 = vrot.slane %v301, 1
      %v303 = vadd.f32 %v301, %v302
      %v304 = vsel %vm294, %v264, 0.0
      %v305 = vsel %vm294, %v265, 0.0
      %v306 = vadd.f32 %v304, %v305
      %v307 = vrot.slane %v306, 4
      %v308 = vadd.f32 %v306, %v307
      %v309 = vrot.slane %v308, 2
      %v310 = vadd.f32 %v308, %v309
      %v311 = vrot.slane %v310, 1
      %v312 = vadd.f32 %v310, %v311
      %v313 = vsel %vm294, %v266, 0.0
      %v314 = vsel %vm294, %v267, 0.0
      %v315 = vadd.f32 %v313, %v314
      %v316 = vrot.slane %v315, 4
      %v317 = vadd.f32 %v315, %v316
      %v318 = vrot.slane %v317, 2
      %v319 = vadd.f32 %v317, %v318
      %v320 = vrot.slane %v319, 1
      %v321 = vadd.f32 %v319, %v320
      %v322 = vsel %vm294, %v268, 0.0
      %v323 = vsel %vm294, %v269, 0.0
      %v324 = vadd.f32 %v322, %v323
      %v325 = vrot.slane %v324, 4
      %v326 = vadd.f32 %v324, %v325
      %v327 = vrot.slane %v326, 2
      %v328 = vadd.f32 %v326, %v327
      %v329 = vrot.slane %v328, 1
      %v330 = vadd.f32 %v328, %v329
      %v331 = vsel %vm294, %v270, 0.0
      %v332 = vsel %vm294, %v271, 0.0
      %v333 = vadd.f32 %v331, %v332
      %v334 = vrot.slane %v333, 4
      %v335 = vadd.f32 %v333, %v334
      %v336 = vrot.slane %v335, 2
      %v337 = vadd.f32 %v335, %v336
      %v338 = vrot.slane %v337, 1
      %v339 = vadd.f32 %v337, %v338
      %v340 = vsel %vm294, %v272, 0.0
      %v341 = vsel %vm294, %v273, 0.0
      %v342 = vadd.f32 %v340, %v341
      %v343 = vrot.slane %v342, 4
      %v344 = vadd.f32 %v342, %v343
      %v345 = vrot.slane %v344, 2
      %v346 = vadd.f32 %v344, %v345
      %v347 = vrot.slane %v346, 1
      %v348 = vadd.f32 %v346, %v347
      %v349 = vsel %vm294, %v274, 0.0
      %v350 = vsel %vm294, %v275, 0.0
      %v351 = vadd.f32 %v349, %v350
      %v352 = vrot.slane %v351, 4
      %v353 = vadd.f32 %v351, %v352
      %v354 = vrot.slane %v353, 2
      %v355 = vadd.f32 %v353, %v354
      %v356 = vrot.slane %v355, 1
      %v357 = vadd.f32 %v355, %v356
      %v358 = vsel %vm294, %v276, 0.0
      %v359 = vsel %vm294, %v277, 0.0
      %v360 = vadd.f32 %v358, %v359
      %v361 = vrot.slane %v360, 4
      %v362 = vadd.f32 %v360, %v361
      %v363 = vrot.slane %v362, 2
      %v364 = vadd.f32 %v362, %v363
      %v365 = vrot.slane %v364, 1
      %v366 = vadd.f32 %v364, %v365
      %v367 = vsel %vm294, %v278, 0.0
      %v368 = vsel %vm294, %v279, 0.0
      %v369 = vadd.f32 %v367, %v368
      %v370 = vrot.slane %v369, 4
      %v371 = vadd.f32 %v369, %v370
      %v372 = vrot.slane %v371, 2
      %v373 = vadd.f32 %v371, %v372
      %v374 = vrot.slane %v373, 1
      %v375 = vadd.f32 %v373, %v374
      %v376 = vsel %vm294, %v280, 0.0
      %v377 = vsel %vm294, %v281, 0.0
      %v378 = vadd.f32 %v376, %v377
      %v379 = vrot.slane %v378, 4
      %v380 = vadd.f32 %v378, %v379
      %v381 = vrot.slane %v380, 2
      %v382 = vadd.f32 %v380, %v381
      %v383 = vrot.slane %v382, 1
      %v384 = vadd.f32 %v382, %v383
      %v385 = vsel %vm294, %v282, 0.0
      %v386 = vsel %vm294, %v283, 0.0
      %v387 = vadd.f32 %v385, %v386
      %v388 = vrot.slane %v387, 4
      %v389 = vadd.f32 %v387, %v388
      %v390 = vrot.slane %v389, 2
      %v391 = vadd.f32 %v389, %v390
      %v392 = vrot.slane %v391, 1
      %v393 = vadd.f32 %v391, %v392
      %v394 = vsel %vm294, %v284, 0.0
      %v395 = vsel %vm294, %v285, 0.0
      %v396 = vadd.f32 %v394, %v395
      %v397 = vrot.slane %v396, 4
      %v398 = vadd.f32 %v396, %v397
      %v399 = vrot.slane %v398, 2
      %v400 = vadd.f32 %v398, %v399
      %v401 = vrot.slane %v400, 1
      %v402 = vadd.f32 %v400, %v401
      %v403 = vsel %vm294, %v286, 0.0
      %v404 = vsel %vm294, %v287, 0.0
      %v405 = vadd.f32 %v403, %v404
      %v406 = vrot.slane %v405, 4
      %v407 = vadd.f32 %v405, %v406
      %v408 = vrot.slane %v407, 2
      %v409 = vadd.f32 %v407, %v408
      %v410 = vrot.slane %v409, 1
      %v411 = vadd.f32 %v409, %v410
      %v412 = vsel %vm294, %v288, 0.0
      %v413 = vsel %vm294, %v289, 0.0
      %v414 = vadd.f32 %v412, %v413
      %v415 = vrot.slane %v414, 4
      %v416 = vadd.f32 %v414, %v415
      %v417 = vrot.slane %v416, 2
      %v418 = vadd.f32 %v416, %v417
      %v419 = vrot.slane %v418, 1
      %v420 = vadd.f32 %v418, %v419
      %v421 = vsel %vm294, %v290, 0.0
      %v422 = vsel %vm294, %v291, 0.0
      %v423 = vadd.f32 %v421, %v422
      %v424 = vrot.slane %v423, 4
      %v425 = vadd.f32 %v423, %v424
      %v426 = vrot.slane %v425, 2
      %v427 = vadd.f32 %v425, %v426
      %v428 = vrot.slane %v427, 1
      %v429 = vadd.f32 %v427, %v428
      %v430 = vsel %vm294, %v292, 0.0
      %v431 = vsel %vm294, %v293, 0.0
      %v432 = vadd.f32 %v430, %v431
      %v433 = vrot.slane %v432, 4
      %v434 = vadd.f32 %v432, %v433
      %v435 = vrot.slane %v434, 2
      %v436 = vadd.f32 %v434, %v435
      %v437 = vrot.slane %v436, 1
      %v438 = vadd.f32 %v436, %v437
      %v439 = vmul.f32 %v303, 0.0625
      %v440 = vmul.f32 %v312, 0.0625
      %v441 = vmul.f32 %v321, 0.0625
      %v442 = vmul.f32 %v330, 0.0625
      %v443 = vmul.f32 %v339, 0.0625
      %v444 = vmul.f32 %v348, 0.0625
      %v445 = vmul.f32 %v357, 0.0625
      %v446 = vmul.f32 %v366, 0.0625
      %v447 = vmul.f32 %v375, 0.0625
      %v448 = vmul.f32 %v384, 0.0625
      %v449 = vmul.f32 %v393, 0.0625
      %v450 = vmul.f32 %v402, 0.0625
      %v451 = vmul.f32 %v411, 0.0625
      %v452 = vmul.f32 %v420, 0.0625
      %v453 = vmul.f32 %v429, 0.0625
      %v454 = vmul.f32 %v438, 0.0625
      %v455 = vadd.f32 %v295, %v304
      %v456 = vadd.f32 %v455, %v313
      %v457 = vadd.f32 %v456, %v322
      %v458 = vadd.f32 %v457, %v331
      %v459 = vadd.f32 %v458, %v340
      %v460 = vadd.f32 %v459, %v349
      %v461 = vadd.f32 %v460, %v358
      %v462 = vadd.f32 %v461, %v367
      %v463 = vadd.f32 %v462, %v376
      %v464 = vadd.f32 %v463, %v385
      %v465 = vadd.f32 %v464, %v394
      %v466 = vadd.f32 %v465, %v403
      %v467 = vadd.f32 %v466, %v412
      %v468 = vadd.f32 %v467, %v421
      %v469 = vadd.f32 %v468, %v430
      %v470 = vadd.f32 %v296, %v305
      %v471 = vadd.f32 %v470, %v314
      %v472 = vadd.f32 %v471, %v323
      %v473 = vadd.f32 %v472, %v332
      %v474 = vadd.f32 %v473, %v341
      %v475 = vadd.f32 %v474, %v350
      %v476 = vadd.f32 %v475, %v359
      %v477 = vadd.f32 %v476, %v368
      %v478 = vadd.f32 %v477, %v377
      %v479 = vadd.f32 %v478, %v386
      %v480 = vadd.f32 %v479, %v395
      %v481 = vadd.f32 %v480, %v404
      %v482 = vadd.f32 %v481, %v413
      %v483 = vadd.f32 %v482, %v422
      %v484 = vadd.f32 %v483, %v431
      %v485 = vmul.f32 %v469, 0.0625
      %v486 = vmul.f32 %v484, 0.0625
      %v487 = vld [vmem:[%s2] sm:$0x1]
      %v488 = vpack.c.bf16 %v439, %v439
      %v489 = vpack.c.bf16 %v440, %v440
      %v490 = vpack.c.bf16 %v441, %v441
      %v491 = vpack.c.bf16 %v442, %v442
      %v492 = vpack.c.bf16 %v443, %v443
      %v493 = vpack.c.bf16 %v444, %v444
      %v494 = vpack.c.bf16 %v445, %v445
      %v495 = vpack.c.bf16 %v446, %v446
      %v496 = vpack.c.bf16 %v447, %v447
      %v497 = vpack.c.bf16 %v448, %v448
      %v498 = vpack.c.bf16 %v449, %v449
      %v499 = vpack.c.bf16 %v450, %v450
      %v500 = vpack.c.bf16 %v451, %v451
      %v501 = vpack.c.bf16 %v452, %v452
      %v502 = vpack.c.bf16 %v453, %v453
      %v503 = vpack.c.bf16 %v454, %v454
      %v504 = vld [vmem:[%s1] sm:$0x3]
      %v521 = vunpack.c.l.b16 %v488
      %v522 = vunpack.c.l.b16 %v489
      %v523 = vunpack.c.l.b16 %v490
      %v524 = vunpack.c.l.b16 %v491
      %v525 = vunpack.c.l.b16 %v492
      %v526 = vunpack.c.l.b16 %v493
      %v527 = vunpack.c.l.b16 %v494
      %v528 = vunpack.c.l.b16 %v495
      %v529 = vunpack.c.l.b16 %v496
      %v530 = vunpack.c.l.b16 %v497
      %v531 = vunpack.c.l.b16 %v498
      %v532 = vunpack.c.l.b16 %v499
      %v533 = vunpack.c.l.b16 %v500
      %v534 = vunpack.c.l.b16 %v501
      %v535 = vunpack.c.l.b16 %v502
      %v536 = vunpack.c.l.b16 %v503
      %vm537 = vcmask 1041409
      %v538 = vsel %vm537, %v522, %v521
      %vm539 = vcmask 1042434
      %v540 = vsel %vm539, %v523, %v538
      %vm541 = vcmask 1043459
      %v542 = vsel %vm541, %v524, %v540
      %vm543 = vcmask 1044484
      %v544 = vsel %vm543, %v525, %v542
      %vm545 = vcmask 1045509
      %v546 = vsel %vm545, %v526, %v544
      %vm547 = vcmask 1046534
      %v548 = vsel %vm547, %v527, %v546
      %vm549 = vcmask 1047559
      %v550 = vsel %vm549, %v528, %v548
      %v551 = vsel %vm537, %v530, %v529
      %v552 = vsel %vm539, %v531, %v551
      %v553 = vsel %vm541, %v532, %v552
      %v554 = vsel %vm543, %v533, %v553
      %v555 = vsel %vm545, %v534, %v554
      %v556 = vsel %vm547, %v535, %v555
      %v557 = vsel %vm549, %v536, %v556
      %v558 = vpack.c.b16 %v557, %v550
      %v560 = vsel %vm294, %v558, 0
      %vm562 = vcmask 1041408
      %v564 = vsel %vm562, %v504, 0
      %566 = vmatprep.subr.bf16.mxu0 0
      %567 = vmatpush1.bf16.msra.mxu0 %v564
      %568 = vmatprep.subr.bf16.mxu0 0
      %569 = vmatpush1.bf16.msra.mxu0 0
      %570 = vmatprep.subr.bf16.mxu0 0
      %571 = vmatpush1.bf16.msra.mxu0 0
      %572 = vmatprep.subr.bf16.mxu0 0
      %573 = vmatpush1.bf16.msra.mxu0 0
      %574 = vmatprep.subr.bf16.mxu0 0
      %575 = vmatpush1.bf16.msra.mxu0 0
      %576 = vmatprep.subr.bf16.mxu0 0
      %577 = vmatpush1.bf16.msra.mxu0 0
      %578 = vmatprep.subr.bf16.mxu0 0
      %579 = vmatpush1.bf16.msra.mxu0 0
      %580 = vmatprep.subr.bf16.mxu0 0
      %581 = vmatpush1.bf16.msra.mxu0 0
      %582 = vmatprep.subr.bf16.mxu0 0
      %583 = vmatpush1.bf16.msra.mxu0 0
      %584 = vmatprep.subr.bf16.mxu0 0
      %585 = vmatpush1.bf16.msra.mxu0 0
      %586 = vmatprep.subr.bf16.mxu0 0
      %587 = vmatpush1.bf16.msra.mxu0 0
      %588 = vmatprep.subr.bf16.mxu0 0
      %589 = vmatpush1.bf16.msra.mxu0 0
      %590 = vmatprep.subr.bf16.mxu0 0
      %591 = vmatpush1.bf16.msra.mxu0 0
      %592 = vmatprep.subr.bf16.mxu0 0
      %593 = vmatpush1.bf16.msra.mxu0 0
      %594 = vmatprep.subr.bf16.mxu0 0
      %595 = vmatpush1.bf16.msra.mxu0 0
      %596 = vmatprep.subr.bf16.mxu0 0
      %597 = vmatpush1.bf16.msra.mxu0 0
      %598 = vmatprep.mubr.bf16.mxu0 0
      %599 = vmatmul.mubr.bf16.gmra.mrb[0].mxu0 %v560
      %v600 = vpop.f32.mrb[0].mxu0
      %v601 = vadd.f32 0.0, %v600
      %v602 = vpop.f32.mrb[0].mxu0
      %v603 = vpop.f32.mrb[0].mxu0
      %v604 = vadd.f32 0.0, %v603
      %v605 = vpop.f32.mrb[0].mxu0
      %606 = vdwg.mxu0
      %s607 = scalar_lea.vmem %s1, 2
      %v608 = vld [vmem:[%s607] sm:$0x3]
      %s609 = scalar_lea.vmem %s1, 4
      %v610 = vld [vmem:[%s609] sm:$0x3]
      %v612 = vsel %vm562, %v610, 0
      %614 = vmatprep.subr.bf16.mxu0 0
      %615 = vmatpush1.bf16.msra.mxu0 %v612
      %616 = vmatprep.subr.bf16.mxu0 0
      %617 = vmatpush1.bf16.msra.mxu0 0
      %618 = vmatprep.subr.bf16.mxu0 0
      %619 = vmatpush1.bf16.msra.mxu0 0
      %620 = vmatprep.subr.bf16.mxu0 0
      %621 = vmatpush1.bf16.msra.mxu0 0
      %622 = vmatprep.subr.bf16.mxu0 0
      %623 = vmatpush1.bf16.msra.mxu0 0
      %624 = vmatprep.subr.bf16.mxu0 0
      %625 = vmatpush1.bf16.msra.mxu0 0
      %626 = vmatprep.subr.bf16.mxu0 0
      %627 = vmatpush1.bf16.msra.mxu0 0
      %628 = vmatprep.subr.bf16.mxu0 0
      %629 = vmatpush1.bf16.msra.mxu0 0
      %630 = vmatprep.subr.bf16.mxu0 0
      %631 = vmatpush1.bf16.msra.mxu0 0
      %632 = vmatprep.subr.bf16.mxu0 0
      %633 = vmatpush1.bf16.msra.mxu0 0
      %634 = vmatprep.subr.bf16.mxu0 0
      %635 = vmatpush1.bf16.msra.mxu0 0
      %636 = vmatprep.subr.bf16.mxu0 0
      %637 = vmatpush1.bf16.msra.mxu0 0
      %638 = vmatprep.subr.bf16.mxu0 0
      %639 = vmatpush1.bf16.msra.mxu0 0
      %640 = vmatprep.subr.bf16.mxu0 0
      %641 = vmatpush1.bf16.msra.mxu0 0
      %642 = vmatprep.subr.bf16.mxu0 0
      %643 = vmatpush1.bf16.msra.mxu0 0
      %644 = vmatprep.subr.bf16.mxu0 0
      %645 = vmatpush1.bf16.msra.mxu0 0
      %646 = vmatprep.mubr.bf16.mxu0 0
      %647 = vmatmul.mubr.bf16.gmra.mrb[0].mxu0 %v560
      %v648 = vpop.f32.mrb[0].mxu0
      %v649 = vadd.f32 0.0, %v648
      %v650 = vpop.f32.mrb[0].mxu0
      %v651 = vpop.f32.mrb[0].mxu0
      %v652 = vadd.f32 0.0, %v651
      %v653 = vpop.f32.mrb[0].mxu0
      %654 = vdwg.mxu0
      %v655 = vlaneseq
      %v656 = vshrl.u32 %v655, 7
      %v657 = vadd.s32 %v656, 8
      %vm658 = vcmp.eq.s32.totalorder %v656, 0
      %vm659 = vcmp.eq.s32.totalorder %v657, 0
      %v660 = vrot.slane %v601, 7
      %v661 = vrot.slane %v604, 7
      %vm662 = vcmp.lt.s32.totalorder %v656, 1
      %v663 = vsel %vm662, %v660, %v661
      %v664 = vsel %vm662, %v661, %v660
      %v665 = vsel %vm658, 0.0, %v664
      %v666 = vsel %vm659, 0.0, %v663
      %vm667 = vcmp.eq.s32.totalorder %v656, 15
      %vm668 = vcmp.eq.s32.totalorder %v657, 15
      %v669 = vrot.slane %v649, 1
      %v670 = vrot.slane %v652, 1
      %vm671 = vcmp.lt.s32.totalorder %v656, 7
      %v672 = vsel %vm671, %v669, %v670
      %v673 = vsel %vm671, %v670, %v669
      %v674 = vsel %vm667, 0.0, %v672
      %v675 = vsel %vm668, 0.0, %v673
      %v677 = vsel %vm562, %v608, 0
      %679 = vmatprep.subr.bf16.mxu0 0
      %680 = vmatpush1.bf16.msra.mxu0 %v677
      %681 = vmatprep.subr.bf16.mxu0 0
      %682 = vmatpush1.bf16.msra.mxu0 0
      %683 = vmatprep.subr.bf16.mxu0 0
      %684 = vmatpush1.bf16.msra.mxu0 0
      %685 = vmatprep.subr.bf16.mxu0 0
      %686 = vmatpush1.bf16.msra.mxu0 0
      %687 = vmatprep.subr.bf16.mxu0 0
      %688 = vmatpush1.bf16.msra.mxu0 0
      %689 = vmatprep.subr.bf16.mxu0 0
      %690 = vmatpush1.bf16.msra.mxu0 0
      %691 = vmatprep.subr.bf16.mxu0 0
      %692 = vmatpush1.bf16.msra.mxu0 0
      %693 = vmatprep.subr.bf16.mxu0 0
      %694 = vmatpush1.bf16.msra.mxu0 0
      %695 = vmatprep.subr.bf16.mxu0 0
      %696 = vmatpush1.bf16.msra.mxu0 0
      %697 = vmatprep.subr.bf16.mxu0 0
      %698 = vmatpush1.bf16.msra.mxu0 0
      %699 = vmatprep.subr.bf16.mxu0 0
      %700 = vmatpush1.bf16.msra.mxu0 0
      %701 = vmatprep.subr.bf16.mxu0 0
      %702 = vmatpush1.bf16.msra.mxu0 0
      %703 = vmatprep.subr.bf16.mxu0 0
      %704 = vmatpush1.bf16.msra.mxu0 0
      %705 = vmatprep.subr.bf16.mxu0 0
      %706 = vmatpush1.bf16.msra.mxu0 0
      %707 = vmatprep.subr.bf16.mxu0 0
      %708 = vmatpush1.bf16.msra.mxu0 0
      %709 = vmatprep.subr.bf16.mxu0 0
      %710 = vmatpush1.bf16.msra.mxu0 0
      %711 = vmatprep.mubr.bf16.mxu0 0
      %712 = vmatmul.mubr.bf16.gmra.mrb[0].mxu0 %v560
      %v713 = vpop.f32.mrb[0].mxu0
      %v714 = vadd.f32 %v665, %v713
      %v715 = vpop.f32.mrb[0].mxu0
      %v716 = vpop.f32.mrb[0].mxu0
      %v717 = vadd.f32 %v666, %v716
      %v718 = vpop.f32.mrb[0].mxu0
      %719 = vdwg.mxu0
      %v720 = vadd.f32 %v714, %v674
      %v721 = vadd.f32 %v717, %v675
      %v723 = vlaneseq
      %v724 = vshrl.u32 %v723, 7
      %v725 = vsub.s32 0, %v724
      %v726 = vrot.slane %v487, %v725
      %v728 = vadd.f32 %v720, %v726
      %v729 = vadd.f32 %v721, %v726
      %v730 = vld [vmem:[%s4] sm:$0x1]
      %v731 = vpack.c.bf16 %v486, %v485
      %v732 = vld [vmem:[%s3] sm:$0x3]
      %v734 = vsel %vm294, %v731, 0
      %v737 = vsel %vm562, %v732, 0
      %739 = vmatprep.subr.bf16.mxu0 0
      %740 = vmatpush1.bf16.msra.mxu0 %v737
      %741 = vmatprep.subr.bf16.mxu0 0
      %742 = vmatpush1.bf16.msra.mxu0 0
      %743 = vmatprep.subr.bf16.mxu0 0
      %744 = vmatpush1.bf16.msra.mxu0 0
      %745 = vmatprep.subr.bf16.mxu0 0
      %746 = vmatpush1.bf16.msra.mxu0 0
      %747 = vmatprep.subr.bf16.mxu0 0
      %748 = vmatpush1.bf16.msra.mxu0 0
      %749 = vmatprep.subr.bf16.mxu0 0
      %750 = vmatpush1.bf16.msra.mxu0 0
      %751 = vmatprep.subr.bf16.mxu0 0
      %752 = vmatpush1.bf16.msra.mxu0 0
      %753 = vmatprep.subr.bf16.mxu0 0
      %754 = vmatpush1.bf16.msra.mxu0 0
      %755 = vmatprep.subr.bf16.mxu0 0
      %756 = vmatpush1.bf16.msra.mxu0 0
      %757 = vmatprep.subr.bf16.mxu0 0
      %758 = vmatpush1.bf16.msra.mxu0 0
      %759 = vmatprep.subr.bf16.mxu0 0
      %760 = vmatpush1.bf16.msra.mxu0 0
      %761 = vmatprep.subr.bf16.mxu0 0
      %762 = vmatpush1.bf16.msra.mxu0 0
      %763 = vmatprep.subr.bf16.mxu0 0
      %764 = vmatpush1.bf16.msra.mxu0 0
      %765 = vmatprep.subr.bf16.mxu0 0
      %766 = vmatpush1.bf16.msra.mxu0 0
      %767 = vmatprep.subr.bf16.mxu0 0
      %768 = vmatpush1.bf16.msra.mxu0 0
      %769 = vmatprep.subr.bf16.mxu0 0
      %770 = vmatpush1.bf16.msra.mxu0 0
      %771 = vmatprep.mubr.bf16.mxu0 0
      %772 = vmatmul.mubr.bf16.gmra.mrb[0].mxu0 %v734
      %v773 = vpop.f32.mrb[0].mxu0
      %v774 = vadd.f32 0.0, %v773
      %v775 = vpop.f32.mrb[0].mxu0
      %v776 = vpop.f32.mrb[0].mxu0
      %v777 = vadd.f32 0.0, %v776
      %v778 = vpop.f32.mrb[0].mxu0
      %779 = vdwg.mxu0
      %s780 = scalar_lea.vmem %s3, 2
      %v781 = vld [vmem:[%s780] sm:$0x3]
      %s782 = scalar_lea.vmem %s3, 4
      %v783 = vld [vmem:[%s782] sm:$0x3]
      %v785 = vsel %vm562, %v783, 0
      %787 = vmatprep.subr.bf16.mxu0 0
      %788 = vmatpush1.bf16.msra.mxu0 %v785
      %789 = vmatprep.subr.bf16.mxu0 0
      %790 = vmatpush1.bf16.msra.mxu0 0
      %791 = vmatprep.subr.bf16.mxu0 0
      %792 = vmatpush1.bf16.msra.mxu0 0
      %793 = vmatprep.subr.bf16.mxu0 0
      %794 = vmatpush1.bf16.msra.mxu0 0
      %795 = vmatprep.subr.bf16.mxu0 0
      %796 = vmatpush1.bf16.msra.mxu0 0
      %797 = vmatprep.subr.bf16.mxu0 0
      %798 = vmatpush1.bf16.msra.mxu0 0
      %799 = vmatprep.subr.bf16.mxu0 0
      %800 = vmatpush1.bf16.msra.mxu0 0
      %801 = vmatprep.subr.bf16.mxu0 0
      %802 = vmatpush1.bf16.msra.mxu0 0
      %803 = vmatprep.subr.bf16.mxu0 0
      %804 = vmatpush1.bf16.msra.mxu0 0
      %805 = vmatprep.subr.bf16.mxu0 0
      %806 = vmatpush1.bf16.msra.mxu0 0
      %807 = vmatprep.subr.bf16.mxu0 0
      %808 = vmatpush1.bf16.msra.mxu0 0
      %809 = vmatprep.subr.bf16.mxu0 0
      %810 = vmatpush1.bf16.msra.mxu0 0
      %811 = vmatprep.subr.bf16.mxu0 0
      %812 = vmatpush1.bf16.msra.mxu0 0
      %813 = vmatprep.subr.bf16.mxu0 0
      %814 = vmatpush1.bf16.msra.mxu0 0
      %815 = vmatprep.subr.bf16.mxu0 0
      %816 = vmatpush1.bf16.msra.mxu0 0
      %817 = vmatprep.subr.bf16.mxu0 0
      %818 = vmatpush1.bf16.msra.mxu0 0
      %819 = vmatprep.mubr.bf16.mxu0 0
      %820 = vmatmul.mubr.bf16.gmra.mrb[0].mxu0 %v734
      %v821 = vpop.f32.mrb[0].mxu0
      %v822 = vadd.f32 0.0, %v821
      %v823 = vpop.f32.mrb[0].mxu0
      %v824 = vpop.f32.mrb[0].mxu0
      %v825 = vadd.f32 0.0, %v824
      %v826 = vpop.f32.mrb[0].mxu0
      %827 = vdwg.mxu0
      %v828 = vrot.slane %v774, 7
      %v829 = vrot.slane %v777, 7
      %v830 = vsel %vm662, %v828, %v829
      %v831 = vsel %vm662, %v829, %v828
      %v832 = vsel %vm658, 0.0, %v831
      %v833 = vsel %vm659, 0.0, %v830
      %v834 = vrot.slane %v822, 1
      %v835 = vrot.slane %v825, 1
      %v836 = vsel %vm671, %v834, %v835
      %v837 = vsel %vm671, %v835, %v834
      %v838 = vsel %vm667, 0.0, %v836
      %v839 = vsel %vm668, 0.0, %v837
      %v841 = vsel %vm562, %v781, 0
      %843 = vmatprep.subr.bf16.mxu0 0
      %844 = vmatpush1.bf16.msra.mxu0 %v841
      %845 = vmatprep.subr.bf16.mxu0 0
      %846 = vmatpush1.bf16.msra.mxu0 0
      %847 = vmatprep.subr.bf16.mxu0 0
      %848 = vmatpush1.bf16.msra.mxu0 0
      %849 = vmatprep.subr.bf16.mxu0 0
      %850 = vmatpush1.bf16.msra.mxu0 0
      %851 = vmatprep.subr.bf16.mxu0 0
      %852 = vmatpush1.bf16.msra.mxu0 0
      %853 = vmatprep.subr.bf16.mxu0 0
      %854 = vmatpush1.bf16.msra.mxu0 0
      %855 = vmatprep.subr.bf16.mxu0 0
      %856 = vmatpush1.bf16.msra.mxu0 0
      %857 = vmatprep.subr.bf16.mxu0 0
      %858 = vmatpush1.bf16.msra.mxu0 0
      %859 = vmatprep.subr.bf16.mxu0 0
      %860 = vmatpush1.bf16.msra.mxu0 0
      %861 = vmatprep.subr.bf16.mxu0 0
      %862 = vmatpush1.bf16.msra.mxu0 0
      %863 = vmatprep.subr.bf16.mxu0 0
      %864 = vmatpush1.bf16.msra.mxu0 0
      %865 = vmatprep.subr.bf16.mxu0 0
      %866 = vmatpush1.bf16.msra.mxu0 0
      %867 = vmatprep.subr.bf16.mxu0 0
      %868 = vmatpush1.bf16.msra.mxu0 0
      %869 = vmatprep.subr.bf16.mxu0 0
      %870 = vmatpush1.bf16.msra.mxu0 0
      %871 = vmatprep.subr.bf16.mxu0 0
      %872 = vmatpush1.bf16.msra.mxu0 0
      %873 = vmatprep.subr.bf16.mxu0 0
      %874 = vmatpush1.bf16.msra.mxu0 0
      %875 = vmatprep.mubr.bf16.mxu0 0
      %876 = vmatmul.mubr.bf16.gmra.mrb[0].mxu0 %v734
      %v877 = vpop.f32.mrb[0].mxu0
      %v878 = vadd.f32 %v832, %v877
      %v879 = vpop.f32.mrb[0].mxu0
      %v880 = vpop.f32.mrb[0].mxu0
      %v881 = vadd.f32 %v833, %v880
      %v882 = vpop.f32.mrb[0].mxu0
      %883 = vdwg.mxu0
      %v884 = vadd.f32 %v878, %v838
      %v885 = vadd.f32 %v881, %v839
      %v887 = vlaneseq
      %v888 = vshrl.u32 %v887, 7
      %v889 = vsub.s32 0, %v888
      %v890 = vrot.slane %v730, %v889
      %v892 = vadd.f32 %v884, %v890
      %v893 = vadd.f32 %v885, %v890
      %v896 = vcombine.high %v728, %v728
      %v898 = vunpack.c.l.s4 1983009808
      %v899 = vunpack.c.0.s8 %v898
      %v900 = vlaneseq
      %v901 = vshrl.u32 %v900, 7
      %v902 = vsub.s32 %v899, %v901
      %v903 = vrot.slane %v728, %v902
      %v905 = vunpack.c.l.s4 1983009808
      %v906 = vunpack.c.0.s8 %v905
      %v907 = vlaneseq
      %v908 = vshrl.u32 %v907, 7
      %v909 = vsub.s32 %v906, %v908
      %v910 = vrot.slane %v896, %v909
      %v911 = vcombine.high %v903, %v903
      %v912 = vcombine.high %v910, %v910
      %v913 = vcombine.high %v729, %v729
      %v915 = vunpack.c.l.s4 1983009808
      %v916 = vunpack.c.0.s8 %v915
      %v917 = vlaneseq
      %v918 = vshrl.u32 %v917, 7
      %v919 = vsub.s32 %v916, %v918
      %v920 = vrot.slane %v729, %v919
      %v922 = vunpack.c.l.s4 1983009808
      %v923 = vunpack.c.0.s8 %v922
      %v924 = vlaneseq
      %v925 = vshrl.u32 %v924, 7
      %v926 = vsub.s32 %v923, %v925
      %v927 = vrot.slane %v913, %v926
      %v928 = vcombine.high %v920, %v920
      %v929 = vcombine.high %v927, %v927
      %vm938 = vcmask 254976
      %v939 = vsel %vm938, %v903, -inf
      %v940 = vrot.slane %v939, 4
      %v941 = vmax.f32 %v939, %v940
      %v942 = vrot.slane %v941, 2
      %v943 = vmax.f32 %v941, %v942
      %v944 = vrot.slane %v943, 1
      %v945 = vmax.f32 %v943, %v944
      %v946 = vsel %vm938, %v911, -inf
      %v947 = vrot.slane %v946, 4
      %v948 = vmax.f32 %v946, %v947
      %v949 = vrot.slane %v948, 2
      %v950 = vmax.f32 %v948, %v949
      %v951 = vrot.slane %v950, 1
      %v952 = vmax.f32 %v950, %v951
      %v953 = vsel %vm938, %v910, -inf
      %v954 = vrot.slane %v953, 4
      %v955 = vmax.f32 %v953, %v954
      %v956 = vrot.slane %v955, 2
      %v957 = vmax.f32 %v955, %v956
      %v958 = vrot.slane %v957, 1
      %v959 = vmax.f32 %v957, %v958
      %v960 = vsel %vm938, %v912, -inf
      %v961 = vrot.slane %v960, 4
      %v962 = vmax.f32 %v960, %v961
      %v963 = vrot.slane %v962, 2
      %v964 = vmax.f32 %v962, %v963
      %v965 = vrot.slane %v964, 1
      %v966 = vmax.f32 %v964, %v965
      %v967 = vsel %vm938, %v920, -inf
      %v968 = vrot.slane %v967, 4
      %v969 = vmax.f32 %v967, %v968
      %v970 = vrot.slane %v969, 2
      %v971 = vmax.f32 %v969, %v970
      %v972 = vrot.slane %v971, 1
      %v973 = vmax.f32 %v971, %v972
      %v974 = vsel %vm938, %v928, -inf
      %v975 = vrot.slane %v974, 4
      %v976 = vmax.f32 %v974, %v975
      %v977 = vrot.slane %v976, 2
      %v978 = vmax.f32 %v976, %v977
      %v979 = vrot.slane %v978, 1
      %v980 = vmax.f32 %v978, %v979
      %v981 = vsel %vm938, %v927, -inf
      %v982 = vrot.slane %v981, 4
      %v983 = vmax.f32 %v981, %v982
      %v984 = vrot.slane %v983, 2
      %v985 = vmax.f32 %v983, %v984
      %v986 = vrot.slane %v985, 1
      %v987 = vmax.f32 %v985, %v986
      %v988 = vsel %vm938, %v929, -inf
      %v989 = vrot.slane %v988, 4
      %v990 = vmax.f32 %v988, %v989
      %v991 = vrot.slane %v990, 2
      %v992 = vmax.f32 %v990, %v991
      %v993 = vrot.slane %v992, 1
      %v994 = vmax.f32 %v992, %v993
      %v1003 = vsel %vm537, %v952, %v945
      %v1004 = vsel %vm539, %v959, %v1003
      %v1005 = vsel %vm541, %v966, %v1004
      %v1006 = vsel %vm543, %v973, %v1005
      %v1007 = vsel %vm545, %v980, %v1006
      %v1008 = vsel %vm547, %v987, %v1007
      %v1009 = vsel %vm549, %v994, %v1008
      %vm1011 = vcmask 261120
      %1012 = vst.msk [vmem:[%s256] sm:$0xff] %vm1011, %v1009
      %v1015 = vcombine.high %v892, %v892
      %v1017 = vunpack.c.l.s4 1983009808
      %v1018 = vunpack.c.0.s8 %v1017
      %v1019 = vlaneseq
      %v1020 = vshrl.u32 %v1019, 7
      %v1021 = vsub.s32 %v1018, %v1020
      %v1022 = vrot.slane %v892, %v1021
      %v1024 = vunpack.c.l.s4 1983009808
      %v1025 = vunpack.c.0.s8 %v1024
      %v1026 = vlaneseq
      %v1027 = vshrl.u32 %v1026, 7
      %v1028 = vsub.s32 %v1025, %v1027
      %v1029 = vrot.slane %v1015, %v1028
      %v1030 = vcombine.high %v1022, %v1022
      %v1031 = vcombine.high %v1029, %v1029
      %v1032 = vcombine.high %v893, %v893
      %v1034 = vunpack.c.l.s4 1983009808
      %v1035 = vunpack.c.0.s8 %v1034
      %v1036 = vlaneseq
      %v1037 = vshrl.u32 %v1036, 7
      %v1038 = vsub.s32 %v1035, %v1037
      %v1039 = vrot.slane %v893, %v1038
      %v1041 = vunpack.c.l.s4 1983009808
      %v1042 = vunpack.c.0.s8 %v1041
      %v1043 = vlaneseq
      %v1044 = vshrl.u32 %v1043, 7
      %v1045 = vsub.s32 %v1042, %v1044
      %v1046 = vrot.slane %v1032, %v1045
      %v1047 = vcombine.high %v1039, %v1039
      %v1048 = vcombine.high %v1046, %v1046
      %v1057 = vsel %vm938, %v1022, -inf
      %v1058 = vrot.slane %v1057, 4
      %v1059 = vmax.f32 %v1057, %v1058
      %v1060 = vrot.slane %v1059, 2
      %v1061 = vmax.f32 %v1059, %v1060
      %v1062 = vrot.slane %v1061, 1
      %v1063 = vmax.f32 %v1061, %v1062
      %v1064 = vsel %vm938, %v1030, -inf
      %v1065 = vrot.slane %v1064, 4
      %v1066 = vmax.f32 %v1064, %v1065
      %v1067 = vrot.slane %v1066, 2
      %v1068 = vmax.f32 %v1066, %v1067
      %v1069 = vrot.slane %v1068, 1
      %v1070 = vmax.f32 %v1068, %v1069
      %v1071 = vsel %vm938, %v1029, -inf
      %v1072 = vrot.slane %v1071, 4
      %v1073 = vmax.f32 %v1071, %v1072
      %v1074 = vrot.slane %v1073, 2
      %v1075 = vmax.f32 %v1073, %v1074
      %v1076 = vrot.slane %v1075, 1
      %v1077 = vmax.f32 %v1075, %v1076
      %v1078 = vsel %vm938, %v1031, -inf
      %v1079 = vrot.slane %v1078, 4
      %v1080 = vmax.f32 %v1078, %v1079
      %v1081 = vrot.slane %v1080, 2
      %v1082 = vmax.f32 %v1080, %v1081
      %v1083 = vrot.slane %v1082, 1
      %v1084 = vmax.f32 %v1082, %v1083
      %v1085 = vsel %vm938, %v1039, -inf
      %v1086 = vrot.slane %v1085, 4
      %v1087 = vmax.f32 %v1085, %v1086
      %v1088 = vrot.slane %v1087, 2
      %v1089 = vmax.f32 %v1087, %v1088
      %v1090 = vrot.slane %v1089, 1
      %v1091 = vmax.f32 %v1089, %v1090
      %v1092 = vsel %vm938, %v1047, -inf
      %v1093 = vrot.slane %v1092, 4
      %v1094 = vmax.f32 %v1092, %v1093
      %v1095 = vrot.slane %v1094, 2
      %v1096 = vmax.f32 %v1094, %v1095
      %v1097 = vrot.slane %v1096, 1
      %v1098 = vmax.f32 %v1096, %v1097
      %v1099 = vsel %vm938, %v1046, -inf
      %v1100 = vrot.slane %v1099, 4
      %v1101 = vmax.f32 %v1099, %v1100
      %v1102 = vrot.slane %v1101, 2
      %v1103 = vmax.f32 %v1101, %v1102
      %v1104 = vrot.slane %v1103, 1
      %v1105 = vmax.f32 %v1103, %v1104
      %v1106 = vsel %vm938, %v1048, -inf
      %v1107 = vrot.slane %v1106, 4
      %v1108 = vmax.f32 %v1106, %v1107
      %v1109 = vrot.slane %v1108, 2
      %v1110 = vmax.f32 %v1108, %v1109
      %v1111 = vrot.slane %v1110, 1
      %v1112 = vmax.f32 %v1110, %v1111
      %v1121 = vsel %vm537, %v1070, %v1063
      %v1122 = vsel %vm539, %v1077, %v1121
      %v1123 = vsel %vm541, %v1084, %v1122
      %v1124 = vsel %vm543, %v1091, %v1123
      %v1125 = vsel %vm545, %v1098, %v1124
      %v1126 = vsel %vm547, %v1105, %v1125
      %v1127 = vsel %vm549, %v1112, %v1126
      %1129 = vst.msk [vmem:[%s260] sm:$0xff] %vm1011, %v1127
      %p1130 = scmp.lt.s32.totalorder %s18, 1
      %s1131 = scalar_select %p1130, %s18, 1
      %s1132 = smul.addr %s1131, 8
      %s1133 = scalar_lea.vmem %s5, %s1132
      %p1134 = scmp.lt.s32.totalorder %s18, 1
      %s1135 = scalar_select %p1134, %s18, 1
      %s1136 = smul.addr %s1135, 8
      %s1137 = scalar_lea.vmem %s6, %s1136
      // Predicated region
      $region41: #{sp_block_v1_forward.2} parent=39 // pred_check
        %p1138 = pneg %p146
      $region42: #{sp_block_v1_forward.2} parent=39 // pred_check_branch
        %1140 = sbr.rel (%p1138) target = $region44
      $region43: #{sp_block_v1_forward.2} parent=39 // pred_region
        _
      $region44: #{sp_block_v1_forward.2} parent=39 // pred_fallthru
        _
      // Predicated region
      $region45: #{sp_block_v1_forward.2} parent=39 // pred_check
        %p1141 = pneg %p172
      $region46: #{sp_block_v1_forward.2} parent=39 // pred_check_branch
        %1143 = sbr.rel (%p1141) target = $region48
      $region47: #{sp_block_v1_forward.2} parent=39 // pred_region
        _
      $region48: #{sp_block_v1_forward.2} parent=39 // pred_fallthru
        _
    $region40: #{sp_block_v1_forward.2} parent=5 // pred_fallthru
      _
    %p1144 = scmp.le.s32.totalorder 2, %s13
    // Predicated region
    $region49: #{sp_block_v1_forward.2} parent=5 // pred_check
      %p1145 = pneg %p1144
    $region50: #{sp_block_v1_forward.2} parent=5 // pred_check_branch
      %1147 = sbr.rel (%p1145) target = $region52
    $region51: #{sp_block_v1_forward.2} parent=5 // pred_region
      %s1148 = ssub.s32 %s13, 2
      // Predicated region
      $region53: #{sp_block_v1_forward.2} parent=51 // pred_check
        %p1149 = pneg %p152
      $region54: #{sp_block_v1_forward.2} parent=51 // pred_check_branch
        %1151 = sbr.rel (%p1149) target = $region56
      $region55: #{sp_block_v1_forward.2} parent=51 // pred_region
        %p1152 = scmp.lt.s32.totalorder %s19, 1
        %s1153 = scalar_select %p1152, %s19, 1
        %s1154 = smul.addr %s1153, 8
        %s1155 = scalar_lea.vmem %s5, %s1154
      $region56: #{sp_block_v1_forward.2} parent=51 // pred_fallthru
        _
      // Predicated region
      $region57: #{sp_block_v1_forward.2} parent=51 // pred_check
        %p1156 = pneg %p178
      $region58: #{sp_block_v1_forward.2} parent=51 // pred_check_branch
        %1158 = sbr.rel (%p1156) target = $region60
      $region59: #{sp_block_v1_forward.2} parent=51 // pred_region
        %p1159 = scmp.lt.s32.totalorder %s19, 1
        %s1160 = scalar_select %p1159, %s19, 1
        %s1161 = smul.addr %s1160, 8
        %s1162 = scalar_lea.vmem %s6, %s1161
      $region60: #{sp_block_v1_forward.2} parent=51 // pred_fallthru
        _
    $region52: #{sp_block_v1_forward.2} parent=5 // pred_fallthru
      _
  $region6: #{sp_block_v1_forward.2} parent=0 // loop_footer
    %s17 = sadd.s32 1, %s13
  $region7: #{sp_block_v1_forward.2} parent=0 // loop_footer_branch
    %12 = sbr.rel target = $region3
  $region8: #{sp_block_v1_forward.2} parent=0 // loop_exit
    _

</llo_original>
